<compile_context>
chip_gen: v6e
topology: v6e:2x2x1
jax: 0.10.0
libtpu: 0.0.40
codegen_flags: <defaults>
</compile_context>

<pallas_src>
import functools
import math

import jax
import jax.numpy as jnp
from jax import lax
from jax.experimental import pallas as pl
from jax.experimental.pallas import tpu as pltpu


# -----------------------------------------------------------------------------
# helpers
# -----------------------------------------------------------------------------
def _layernorm(x, w, b, eps=1e-5):
    """LayerNorm over the last dim. x: (R, D) f32, w/b: (1, D) f32."""
    mu = jnp.mean(x, axis=-1, keepdims=True)
    var = jnp.mean((x - mu) ** 2, axis=-1, keepdims=True)
    return (x - mu) * lax.rsqrt(var + eps) * w + b


# -----------------------------------------------------------------------------
# Pallas kernel: one transformer layer per grid step (layer axis = grid axis 1)
# -----------------------------------------------------------------------------
def text_encoder_kernel(
    # inputs
    prompts_ref, pos_ref, onehot_ref,
    ln1_w_ref, ln1_b_ref, in_w_ref, in_b_ref,
    out_w_ref, out_b_ref, ln2_w_ref, ln2_b_ref,
    fc_w_ref, fc_b_ref, proj_w_ref, proj_b_ref,
    lnf_w_ref, lnf_b_ref, tproj_ref,
    # output
    o_ref,
    # scratch: residual stream carried across the layer grid axis
    x_ref,
    *, num_heads, hidden_chunk, compute_dtype,
):
    layer = pl.program_id(1)
    num_layers = pl.num_programs(1)

    TB, L, D = x_ref.shape
    H = num_heads
    hd = D // H
    cd = compute_dtype
    f32 = jnp.float32

    # ---- layer 0: initialize the residual stream ----------------------------
    @pl.when(layer == 0)
    def _init():
        x_ref[...] = prompts_ref[...] + pos_ref[...][None, :, :]

    # residual stream in f32, flattened to (TB*L, D) for the dense matmuls.
    # L is padded to a multiple of 8 by the wrapper so this reshape is
    # layout-free.
    x2 = x_ref[...].reshape(TB * L, D)

    # causal mask (lower-triangular allowed); padded key columns are never
    # attended by real rows because col <= row.
    row = lax.broadcasted_iota(jnp.int32, (L, L), 0)
    col = lax.broadcasted_iota(jnp.int32, (L, L), 1)
    causal = (col <= row)[None, :, :]                     # (1, L, L) bool

    # ---- multi-head self attention ------------------------------------------
    xn = _layernorm(x2, ln1_w_ref[0], ln1_b_ref[0])       # (TB*L, D) f32
    qkv = (jnp.dot(xn.astype(cd), in_w_ref[0],
                   preferred_element_type=f32)
           + in_b_ref[0])                                 # (TB*L, 3D) f32
    qkv3 = qkv.reshape(TB, L, 3 * D)
    q = qkv3[:, :, 0:D]                  # 1/sqrt(hd) pre-folded into in_w/in_b
    k = qkv3[:, :, D:2 * D]
    v = qkv3[:, :, 2 * D:3 * D]

    # TODO(synk): replace this per-head loop with a single fused contraction
    # once Mosaic guarantees multi-batch-dim dot_general / sublane transposes.
    head_outs = []
    for h in range(H):                                    # small loop over heads,
        sl = slice(h * hd, (h + 1) * hd)                  # fully batched over TB
        qh = q[:, :, sl].astype(cd)                       # (TB, L, hd)
        kh = k[:, :, sl].astype(cd)
        vh = v[:, :, sl].astype(cd)
        s = jnp.einsum("bld,bmd->blm", qh, kh,
                       preferred_element_type=f32)        # (TB, L, L) f32
        s = jnp.where(causal, s, -1e30)
        s = s - jnp.max(s, axis=-1, keepdims=True)
        p = jnp.exp(s)
        denom = jnp.sum(p, axis=-1, keepdims=True)
        p = p * pl.reciprocal(denom, approx=True)         # EUP reciprocal
        head_outs.append(
            jnp.einsum("blm,bmd->bld", p.astype(cd), vh,
                       preferred_element_type=f32))       # (TB, L, hd)
    attn = jnp.concatenate(head_outs, axis=-1).reshape(TB * L, D)

    attn = (jnp.dot(attn.astype(cd), out_w_ref[0],
                    preferred_element_type=f32)
            + out_b_ref[0])                               # (TB*L, D) f32
    x2 = x2 + attn

    # ---- MLP with QuickGELU, chunked along the 4D hidden dim ---------------
    xn = _layernorm(x2, ln2_w_ref[0], ln2_b_ref[0]).astype(cd)
    hidden = fc_w_ref.shape[-1]                           # 4*D (static)
    hc = hidden_chunk
    n_chunks = hidden // hc
    mlp = jnp.zeros((TB * L, D), f32) + proj_b_ref[0]     # f32 accumulator
    for c in range(n_chunks):
        cs = slice(c * hc, (c + 1) * hc)
        hid = (jnp.dot(xn, fc_w_ref[0, :, cs],
                       preferred_element_type=f32)
               + fc_b_ref[0][:, cs])                      # (TB*L, hc) f32
        hid = hid * jax.nn.sigmoid(1.702 * hid)           # QuickGELU (f32)
        mlp = mlp + jnp.dot(hid.astype(cd), proj_w_ref[0, cs, :],
                            preferred_element_type=f32)   # (TB*L, D) f32
    x2 = x2 + mlp

    # write the residual stream back for the next layer
    x_ref[...] = x2.reshape(TB, L, D)

    # ---- last layer: final LN + EOT gather + text projection ----------------
    @pl.when(layer == num_layers - 1)
    def _final():
        xf = _layernorm(x2, lnf_w_ref[...], lnf_b_ref[...]).reshape(TB, L, D)
        # lane-dense one-hot EOT gather as a batched matvec (MXU, f32 exact)
        eot = jnp.einsum("bql,bld->bqd", onehot_ref[...], xf,
                         preferred_element_type=f32)      # (TB, 1, D)
        proj = jnp.dot(eot.reshape(TB, D).astype(cd), tproj_ref[...],
                       preferred_element_type=f32)        # (TB, Epad) f32
        o_ref[...] = proj[:, None, :]                     # (TB, 1, Epad)


# -----------------------------------------------------------------------------
# one-time parameter preparation (transpose / cast / pad / scale-fold)
# -----------------------------------------------------------------------------
def prepare_params(params, num_heads, lane=128, weight_dtype=jnp.bfloat16):
    """Convert PyTorch-layout params to kernel layout once at load time:
      * matmul weights -> (in, out) layout, cast to bf16 (MXU native)
      * 1/sqrt(head_dim) folded into the Q rows of the in-projection
      * per-layer vectors -> (NL, 1, X) so per-layer (1, 1, X) blocks tile cleanly
      * text_projection zero-padded to a lane-dense multiple of 128 outputs
    """
    NL, D = params["ln1_w"].shape
    E = params["text_projection"].shape[1]
    Epad = ((E + lane - 1) // lane) * lane
    hd = D // num_heads
    scale = 1.0 / math.sqrt(hd)

    # PyTorch in_proj weight is (3D, D) with rows 0:D producing Q.
    in_w = params["in_w"].at[:, 0:D, :].multiply(scale)
    in_b = params["in_b"].at[:, 0:D].multiply(scale)
    tproj = jnp.pad(params["text_projection"], ((0, 0), (0, Epad - E)))

    kp = {
        "ln1_w": params["ln1_w"].reshape(NL, 1, D),
        "ln1_b": params["ln1_b"].reshape(NL, 1, D),
        "in_w": jnp.transpose(in_w, (0, 2, 1)).astype(weight_dtype),
        "in_b": in_b.reshape(NL, 1, 3 * D),
        "out_w": jnp.transpose(params["out_w"], (0, 2, 1)).astype(weight_dtype),
        "out_b": params["out_b"].reshape(NL, 1, D),
        "ln2_w": params["ln2_w"].reshape(NL, 1, D),
        "ln2_b": params["ln2_b"].reshape(NL, 1, D),
        "fc_w": jnp.transpose(params["fc_w"], (0, 2, 1)).astype(weight_dtype),
        "fc_b": params["fc_b"].reshape(NL, 1, 4 * D),
        "proj_w": jnp.transpose(params["proj_w"], (0, 2, 1)).astype(weight_dtype),
        "proj_b": params["proj_b"].reshape(NL, 1, D),
        "lnf_w": params["lnf_w"].reshape(1, D),
        "lnf_b": params["lnf_b"].reshape(1, D),
        "text_projection": tproj.astype(weight_dtype),
    }
    return kp, E, Epad


# -----------------------------------------------------------------------------
# VMEM budgeting / batch-tile selection (per-generation sizing)
# -----------------------------------------------------------------------------
def _vmem_budget_bytes():
    """~75% of physical VMEM: ~96 MiB on v5e/v6e (128 MiB), ~48 MiB on v7x (64 MiB)."""
    try:
        phys = pltpu.get_tpu_info().vmem_capacity_bytes
    except Exception:
        phys = 64 * 1024 * 1024          # conservative (v7x-sized) fallback
    return int(phys * 3 // 4)


def _largest_divisor_at_most(n, target):
    d = min(n, target)
    while n % d:
        d -= 1
    return d


def _estimate_vmem_bytes(tb, L, D, hidden_chunk, Epad):
    """Rough per-grid-step VMEM footprint for batch tile `tb` (bytes)."""
    f32, bf16 = 4, 2
    hidden = 4 * D
    rows = tb * L
    # double-buffered per-layer bf16 weights + biases
    w = 2 * (3 * D * D + D * D + D * hidden + hidden * D
             + (3 * D + D + hidden + D)) * bf16
    # small resident params (final LN, padded projection, per-layer LN vectors)
    w += (2 * D + D * Epad) * bf16 + 8 * D * f32
    # double-buffered pipelined activation blocks + output block
    blocks = 2 * (tb * L * D * f32 + tb * L * f32 + tb * Epad * f32) + 2 * L * D * f32
    # residual carry scratch
    scratch = tb * L * D * f32
    # in-kernel temporaries: x2/xn/attn/mlp, qkv (f32 + bf16 cast), per-head
    # scores (one head live at a time), head outputs, chunked MLP hidden.
    act = rows * (4 * D * f32 + 3 * D * (f32 + bf16) + D * f32
                  + hidden_chunk * (f32 + bf16)) + 3 * tb * L * L * f32
    return w + blocks + scratch + act


def _choose_batch_tile(B, L, D, hidden_chunk, Epad, budget):
    divisors = sorted({d for d in range(1, B + 1) if B % d == 0}, reverse=True)
    fitting = [d for d in divisors
               if _estimate_vmem_bytes(d, L, D, hidden_chunk, Epad) <= budget]
    if not fitting:
        return 1
    if B > 1:
        # prefer >= 2 batch tiles so the "parallel" axis can split across
        # v7x's two TensorCores (largest such tile => fewest weight re-streams)
        multi = [d for d in fitting if B // d >= 2]
        if multi:
            return multi[0]
    return fitting[0]


# -----------------------------------------------------------------------------
# wrapper
# -----------------------------------------------------------------------------
def text_encoder_forward(prompts, pos_emb, tokenized_prompts, kernel_params,
                         num_heads, out_dim, batch_tile=None, hidden_chunk=None,
                         compute_dtype=jnp.bfloat16, vmem_limit_bytes=None):
    B, L, D = prompts.shape
    NL = kernel_params["ln1_w"].shape[0]
    Epad = kernel_params["text_projection"].shape[1]
    hidden = kernel_params["fc_w"].shape[-1]

    # glue (plain JAX): EOT index -> lane-dense one-hot (B, 1, Lp); pad L to a
    # multiple of 8 (sublane granularity, e.g. 77 -> 80) but NOT to 128.
    Lp = ((L + 7) // 8) * 8
    eot_idx = jnp.argmax(tokenized_prompts, axis=-1)                  # (B,)
    eot_onehot = jax.nn.one_hot(eot_idx, Lp, dtype=jnp.float32).reshape(B, 1, Lp)
    if Lp != L:
        prompts = jnp.pad(prompts, ((0, 0), (0, Lp - L), (0, 0)))
        pos_emb = jnp.pad(pos_emb, ((0, Lp - L), (0, 0)))
    L = Lp

    if hidden_chunk is None:
        hidden_chunk = _largest_divisor_at_most(hidden, 512)
    budget = int(vmem_limit_bytes) if vmem_limit_bytes is not None else _vmem_budget_bytes()

    if batch_tile is None:
        TB = _choose_batch_tile(B, L, D, hidden_chunk, Epad, budget)
    else:
        TB = batch_tile
    assert B % TB == 0
    nb = B // TB

    kp = kernel_params
    args = [
        prompts, pos_emb, eot_onehot,
        kp["ln1_w"], kp["ln1_b"], kp["in_w"], kp["in_b"],
        kp["out_w"], kp["out_b"], kp["ln2_w"], kp["ln2_b"],
        kp["fc_w"], kp["fc_b"], kp["proj_w"], kp["proj_b"],
        kp["lnf_w"], kp["lnf_b"], kp["text_projection"],
    ]

    def batch_spec(shape):
        nrest = len(shape) - 1
        return pl.BlockSpec((TB,) + tuple(shape[1:]),
                            lambda b, l, n=nrest: (b,) + (0,) * n)

    def layer_spec(shape):
        nrest = len(shape) - 1
        return pl.BlockSpec((1,) + tuple(shape[1:]),
                            lambda b, l, n=nrest: (l,) + (0,) * n)

    def full_spec(shape):
        nd = len(shape)
        return pl.BlockSpec(tuple(shape), lambda b, l, n=nd: (0,) * n)

    in_specs = [
        batch_spec(prompts.shape),                 # prompts
        full_spec(pos_emb.shape),                  # positional embedding
        batch_spec(eot_onehot.shape),              # EOT one-hot (B, 1, L)
        layer_spec(kp["ln1_w"].shape), layer_spec(kp["ln1_b"].shape),
        layer_spec(kp["in_w"].shape),  layer_spec(kp["in_b"].shape),
        layer_spec(kp["out_w"].shape), layer_spec(kp["out_b"].shape),
        layer_spec(kp["ln2_w"].shape), layer_spec(kp["ln2_b"].shape),
        layer_spec(kp["fc_w"].shape),  layer_spec(kp["fc_b"].shape),
        layer_spec(kp["proj_w"].shape), layer_spec(kp["proj_b"].shape),
        full_spec(kp["lnf_w"].shape), full_spec(kp["lnf_b"].shape),
        full_spec(kp["text_projection"].shape),
    ]

    kernel = functools.partial(text_encoder_kernel,
                               num_heads=num_heads,
                               hidden_chunk=hidden_chunk,
                               compute_dtype=compute_dtype)

    # 3-D (B, 1, Epad) output keeps the block's last two dims equal to the
    # full array dims for ANY batch tile (satisfies the (8,128) block rule)
    # and stays lane-dense.
    out_padded = pl.pallas_call(
        kernel,
        out_shape=jax.ShapeDtypeStruct((B, 1, Epad), jnp.float32),
        grid=(nb, NL),
        in_specs=in_specs,
        out_specs=pl.BlockSpec((TB, 1, Epad), lambda b, l: (b, 0, 0)),
        scratch_shapes=[pltpu.VMEM((TB, L, D), jnp.float32)],
        compiler_params=pltpu.CompilerParams(
            dimension_semantics=("parallel", "arbitrary"),
            vmem_limit_bytes=budget,
        ),
    )(*args)

    return out_padded[:, 0, :out_dim]


# -----------------------------------------------------------------------------
# pure-JAX reference (PyTorch semantics, PyTorch weight layout, f32)
# -----------------------------------------------------------------------------
def reference_forward(prompts, pos_emb, tokenized_prompts, params, num_heads):
    x = prompts + pos_emb[None]
    B, L, D = x.shape
    hd = D // num_heads
    NL = params["ln1_w"].shape[0]

    def ln(x, w, b, eps=1e-5):
        mu = jnp.mean(x, axis=-1, keepdims=True)
        var = jnp.mean((x - mu) ** 2, axis=-1, keepdims=True)
        return (x - mu) / jnp.sqrt(var + eps) * w + b

    mask = jnp.where(
        jnp.arange(L)[None, :] <= jnp.arange(L)[:, None], 0.0, -1e30)

    for l in range(NL):
        xn = ln(x, params["ln1_w"][l], params["ln1_b"][l])
        qkv = xn @ params["in_w"][l].T + params["in_b"][l]
        q, k, v = jnp.split(qkv, 3, axis=-1)
        q = q.reshape(B, L, num_heads, hd).transpose(0, 2, 1, 3)
        k = k.reshape(B, L, num_heads, hd).transpose(0, 2, 1, 3)
        v = v.reshape(B, L, num_heads, hd).transpose(0, 2, 1, 3)
        s = jnp.einsum("bhld,bhmd->bhlm", q, k) / (hd ** 0.5) + mask
        p = jax.nn.softmax(s, axis=-1)
        a = jnp.einsum("bhlm,bhmd->bhld", p, v)
        a = a.transpose(0, 2, 1, 3).reshape(B, L, D)
        a = a @ params["out_w"][l].T + params["out_b"][l]
        x = x + a

        xn = ln(x, params["ln2_w"][l], params["ln2_b"][l])
        h = xn @ params["fc_w"][l].T + params["fc_b"][l]
        h = h * jax.nn.sigmoid(1.702 * h)
        x = x + h @ params["proj_w"][l].T + params["proj_b"][l]

    x = ln(x, params["lnf_w"], params["lnf_b"])
    eot_idx = jnp.argmax(tokenized_prompts, axis=-1)
    return x[jnp.arange(B), eot_idx] @ params["text_projection"]


# -----------------------------------------------------------------------------
# main
# -----------------------------------------------------------------------------
if __name__ == "__main__":
    B, L, D, H, NL, E = 2, 8, 32, 4, 2, 16  # batch, seq, width, heads, layers, embed

    key = jax.random.PRNGKey(0)
    ks = jax.random.split(key, 20)

    def nrm(k, shape, scale=0.02):
        return scale * jax.random.normal(k, shape, dtype=jnp.float32)

    params = {
        "ln1_w": 1.0 + nrm(ks[0], (NL, D)),
        "ln1_b": nrm(ks[1], (NL, D)),
        "in_w": nrm(ks[2], (NL, 3 * D, D)),
        "in_b": nrm(ks[3], (NL, 3 * D)),
        "out_w": nrm(ks[4], (NL, D, D)),
        "out_b": nrm(ks[5], (NL, D)),
        "ln2_w": 1.0 + nrm(ks[6], (NL, D)),
        "ln2_b": nrm(ks[7], (NL, D)),
        "fc_w": nrm(ks[8], (NL, 4 * D, D)),
        "fc_b": nrm(ks[9], (NL, 4 * D)),
        "proj_w": nrm(ks[10], (NL, D, 4 * D)),
        "proj_b": nrm(ks[11], (NL, D)),
        "lnf_w": 1.0 + nrm(ks[12], (D,)),
        "lnf_b": nrm(ks[13], (D,)),
        "text_projection": nrm(ks[14], (D, E)),
    }

    pos_emb = nrm(ks[15], (L, D))
    prompts = nrm(ks[16], (B, L, D), scale=0.5)

    # fake tokenized prompts: EOT token (largest id) placed at different positions
    tokenized = jax.random.randint(ks[17], (B, L), 1, 100, dtype=jnp.int32)
    eot_pos = jnp.array([5, 7], dtype=jnp.int32)
    tokenized = tokenized.at[jnp.arange(B), eot_pos].set(49407)

    # one-time param prep (transpose to (in,out), bf16 cast, scale-fold, lane-pad)
    kernel_params, E_out, Epad = prepare_params(params, num_heads=H)

    out = text_encoder_forward(prompts, pos_emb, tokenized, kernel_params,
                               num_heads=H, out_dim=E_out)
    out = jax.block_until_ready(out)

    ref = reference_forward(prompts, pos_emb, tokenized, params, num_heads=H)
    assert out.shape == (B, E)
    # bf16 MXU operands + approx reciprocal vs f32 reference -> relaxed tolerance
    max_err = jnp.max(jnp.abs(out - ref))
    assert jnp.allclose(out, ref, atol=2e-2, rtol=2e-2), f"max err {max_err}"

    print("KERNEL_OK")
</pallas_src>

<mosaic_0001>
module attributes {stable_mosaic.version = 11 : i64} {
  func.func @text_encoder_kernel(%arg0: i32, %arg1: i32, %arg2: memref<1x8x32xf32, #tpu.memory_space<vmem>>, %arg3: memref<8x32xf32, #tpu.memory_space<vmem>>, %arg4: memref<1x1x8xf32, #tpu.memory_space<vmem>>, %arg5: memref<1x1x32xf32, #tpu.memory_space<vmem>>, %arg6: memref<1x1x32xf32, #tpu.memory_space<vmem>>, %arg7: memref<1x32x96xbf16, #tpu.memory_space<vmem>>, %arg8: memref<1x1x96xf32, #tpu.memory_space<vmem>>, %arg9: memref<1x32x32xbf16, #tpu.memory_space<vmem>>, %arg10: memref<1x1x32xf32, #tpu.memory_space<vmem>>, %arg11: memref<1x1x32xf32, #tpu.memory_space<vmem>>, %arg12: memref<1x1x32xf32, #tpu.memory_space<vmem>>, %arg13: memref<1x32x128xbf16, #tpu.memory_space<vmem>>, %arg14: memref<1x1x128xf32, #tpu.memory_space<vmem>>, %arg15: memref<1x128x32xbf16, #tpu.memory_space<vmem>>, %arg16: memref<1x1x32xf32, #tpu.memory_space<vmem>>, %arg17: memref<1x32xf32, #tpu.memory_space<vmem>>, %arg18: memref<1x32xf32, #tpu.memory_space<vmem>>, %arg19: memref<32x128xbf16, #tpu.memory_space<vmem>>, %arg20: memref<1x1x128xf32, #tpu.memory_space<vmem>>, %arg21: memref<1x8x32xf32, #tpu.memory_space<vmem>>) attributes {dimension_semantics = [#tpu.dimension_semantics<parallel>, #tpu.dimension_semantics<arbitrary>], iteration_bounds = array<i64: 2, 2>, scalar_prefetch = 0 : i64, scratch_operands = 1 : i64, tpu.core_type = #tpu.core_type<tc>, window_params = [{transform_indices = @transform_0, window_bounds = array<i64: 1, 8, 32>}, {pipeline_mode = #tpu.pipeline_mode<synchronous>, transform_indices = @transform_1, window_bounds = array<i64: 8, 32>}, {transform_indices = @transform_2, window_bounds = array<i64: 1, 1, 8>}, {transform_indices = @transform_3, window_bounds = array<i64: 1, 1, 32>}, {transform_indices = @transform_4, window_bounds = array<i64: 1, 1, 32>}, {transform_indices = @transform_5, window_bounds = array<i64: 1, 32, 96>}, {transform_indices = @transform_6, window_bounds = array<i64: 1, 1, 96>}, {transform_indices = @transform_7, window_bounds = array<i64: 1, 32, 32>}, {transform_indices = @transform_8, window_bounds = array<i64: 1, 1, 32>}, {transform_indices = @transform_9, window_bounds = array<i64: 1, 1, 32>}, {transform_indices = @transform_10, window_bounds = array<i64: 1, 1, 32>}, {transform_indices = @transform_11, window_bounds = array<i64: 1, 32, 128>}, {transform_indices = @transform_12, window_bounds = array<i64: 1, 1, 128>}, {transform_indices = @transform_13, window_bounds = array<i64: 1, 128, 32>}, {transform_indices = @transform_14, window_bounds = array<i64: 1, 1, 32>}, {pipeline_mode = #tpu.pipeline_mode<synchronous>, transform_indices = @transform_15, window_bounds = array<i64: 1, 32>}, {pipeline_mode = #tpu.pipeline_mode<synchronous>, transform_indices = @transform_16, window_bounds = array<i64: 1, 32>}, {pipeline_mode = #tpu.pipeline_mode<synchronous>, transform_indices = @transform_17, window_bounds = array<i64: 32, 128>}, {transform_indices = @transform_18, window_bounds = array<i64: 1, 1, 128>}]} {
    %c0_i32 = arith.constant 0 : i32
    %0 = arith.cmpi eq, %arg1, %c0_i32 : i32
    %1 = arith.extui %0 : i1 to i32
    %c0_i32_0 = arith.constant 0 : i32
    %2 = arith.cmpi ne, %1, %c0_i32_0 : i32
    scf.if %2 {
      %c0_79 = arith.constant 0 : index
      %c0_80 = arith.constant 0 : index
      %c0_81 = arith.constant 0 : index
      %200 = vector.load %arg2[%c0_79, %c0_80, %c0_81] : memref<1x8x32xf32, #tpu.memory_space<vmem>>, vector<1x8x32xf32>
      %c0_82 = arith.constant 0 : index
      %c0_83 = arith.constant 0 : index
      %201 = vector.load %arg3[%c0_82, %c0_83] : memref<8x32xf32, #tpu.memory_space<vmem>>, vector<8x32xf32>
      %202 = vector.shape_cast %201 : vector<8x32xf32> to vector<1x8x32xf32>
      %203 = arith.addf %200, %202 : vector<1x8x32xf32>
      %c0_84 = arith.constant 0 : index
      %c0_85 = arith.constant 0 : index
      %c0_86 = arith.constant 0 : index
      %204 = vector.load %arg21[%c0_84, %c0_85, %c0_86] : memref<1x8x32xf32, #tpu.memory_space<vmem>>, vector<1x8x32xf32>
      tpu.vector_store %arg21[%c0_84, %c0_85, %c0_86], %203 {strides = array<i32>} : memref<1x8x32xf32, #tpu.memory_space<vmem>>, vector<1x8x32xf32>,
    } else {
    }
    %c0 = arith.constant 0 : index
    %c0_1 = arith.constant 0 : index
    %c0_2 = arith.constant 0 : index
    %3 = vector.load %arg21[%c0, %c0_1, %c0_2] : memref<1x8x32xf32, #tpu.memory_space<vmem>>, vector<1x8x32xf32>
    %4 = vector.shape_cast %3 : vector<1x8x32xf32> to vector<8x32xf32>
    %5 = tpu.iota {dimensions = array<i32: 0>} : vector<8x8xi32>
    %6 = tpu.iota {dimensions = array<i32: 1>} : vector<8x8xi32>
    %7 = arith.cmpi sle, %6, %5 : vector<8x8xi32>
    %8 = vector.shape_cast %7 : vector<8x8xi1> to vector<1x8x8xi1>
    %c0_3 = arith.constant 0 : index
    %c0_4 = arith.constant 0 : index
    %c0_5 = arith.constant 0 : index
    %9 = vector.load %arg5[%c0_3, %c0_4, %c0_5] : memref<1x1x32xf32, #tpu.memory_space<vmem>>, vector<1x1x32xf32>
    %10 = vector.shape_cast %9 : vector<1x1x32xf32> to vector<1x32xf32>
    %c0_6 = arith.constant 0 : index
    %c0_7 = arith.constant 0 : index
    %c0_8 = arith.constant 0 : index
    %11 = vector.load %arg6[%c0_6, %c0_7, %c0_8] : memref<1x1x32xf32, #tpu.memory_space<vmem>>, vector<1x1x32xf32>
    %12 = vector.shape_cast %11 : vector<1x1x32xf32> to vector<1x32xf32>
    %cst = arith.constant dense<0.000000e+00> : vector<8xf32>
    %13 = vector.multi_reduction <add>, %4, %cst [1] : vector<8x32xf32> to vector<8xf32>
    %14 = vector.shape_cast %13 : vector<8xf32> to vector<8x1xf32>
    %cst_9 = arith.constant 3.200000e+01 : f32
    %15 = vector.broadcast %cst_9 : f32 to vector<8x1xf32>
    %16 = arith.divf %14, %15 : vector<8x1xf32>
    %17 = vector.broadcast %16 : vector<8x1xf32> to vector<8x32xf32>
    %18 = arith.subf %4, %17 : vector<8x32xf32>
    %19 = arith.mulf %18, %18 : vector<8x32xf32>
    %cst_10 = arith.constant dense<0.000000e+00> : vector<8xf32>
    %20 = vector.multi_reduction <add>, %19, %cst_10 [1] : vector<8x32xf32> to vector<8xf32>
    %21 = vector.shape_cast %20 : vector<8xf32> to vector<8x1xf32>
    %cst_11 = arith.constant 3.200000e+01 : f32
    %22 = vector.broadcast %cst_11 : f32 to vector<8x1xf32>
    %23 = arith.divf %21, %22 : vector<8x1xf32>
    %24 = vector.broadcast %16 : vector<8x1xf32> to vector<8x32xf32>
    %25 = arith.subf %4, %24 : vector<8x32xf32>
    %cst_12 = arith.constant 9.99999974E-6 : f32
    %26 = vector.broadcast %cst_12 : f32 to vector<8x1xf32>
    %27 = arith.addf %23, %26 : vector<8x1xf32>
    %28 = math.rsqrt %27 : vector<8x1xf32>
    %29 = vector.broadcast %28 : vector<8x1xf32> to vector<8x32xf32>
    %30 = arith.mulf %25, %29 : vector<8x32xf32>
    %31 = vector.broadcast %10 : vector<1x32xf32> to vector<8x32xf32>
    %32 = arith.mulf %30, %31 : vector<8x32xf32>
    %33 = vector.broadcast %12 : vector<1x32xf32> to vector<8x32xf32>
    %34 = arith.addf %32, %33 : vector<8x32xf32>
    %35 = arith.truncf %34 : vector<8x32xf32> to vector<8x32xbf16>
    %c0_13 = arith.constant 0 : index
    %c0_14 = arith.constant 0 : index
    %c0_15 = arith.constant 0 : index
    %36 = vector.load %arg7[%c0_13, %c0_14, %c0_15] : memref<1x32x96xbf16, #tpu.memory_space<vmem>>, vector<1x32x96xbf16>
    %37 = vector.shape_cast %36 : vector<1x32x96xbf16> to vector<32x96xbf16>
    %cst_16 = arith.constant dense<0.000000e+00> : vector<8x96xf32>
    %38 = tpu.matmul %35, %37, %cst_16 {dimension_numbers = #tpu.dot_dimension_numbers<[1], [0], [0], [1], [0, 0, 1, 1], [], []>} : vector<8x32xbf16>, vector<32x96xbf16>, vector<8x96xf32> -> vector<8x96xf32>
    %c0_17 = arith.constant 0 : index
    %c0_18 = arith.constant 0 : index
    %c0_19 = arith.constant 0 : index
    %39 = vector.load %arg8[%c0_17, %c0_18, %c0_19] : memref<1x1x96xf32, #tpu.memory_space<vmem>>, vector<1x1x96xf32>
    %40 = vector.shape_cast %39 : vector<1x1x96xf32> to vector<1x96xf32>
    %41 = vector.broadcast %40 : vector<1x96xf32> to vector<8x96xf32>
    %42 = arith.addf %38, %41 : vector<8x96xf32>
    %43 = vector.shape_cast %42 : vector<8x96xf32> to vector<1x8x96xf32>
    %44 = vector.extract_strided_slice %43 {offsets = [0, 0, 0], sizes = [1, 8, 32], strides = [1, 1, 1]} : vector<1x8x96xf32> to vector<1x8x32xf32>
    %45 = vector.extract_strided_slice %43 {offsets = [0, 0, 32], sizes = [1, 8, 32], strides = [1, 1, 1]} : vector<1x8x96xf32> to vector<1x8x32xf32>
    %46 = vector.extract_strided_slice %43 {offsets = [0, 0, 64], sizes = [1, 8, 32], strides = [1, 1, 1]} : vector<1x8x96xf32> to vector<1x8x32xf32>
    %47 = vector.extract_strided_slice %44 {offsets = [0, 0, 0], sizes = [1, 8, 8], strides = [1, 1, 1]} : vector<1x8x32xf32> to vector<1x8x8xf32>
    %48 = arith.truncf %47 : vector<1x8x8xf32> to vector<1x8x8xbf16>
    %49 = vector.extract_strided_slice %45 {offsets = [0, 0, 0], sizes = [1, 8, 8], strides = [1, 1, 1]} : vector<1x8x32xf32> to vector<1x8x8xf32>
    %50 = arith.truncf %49 : vector<1x8x8xf32> to vector<1x8x8xbf16>
    %51 = vector.extract_strided_slice %46 {offsets = [0, 0, 0], sizes = [1, 8, 8], strides = [1, 1, 1]} : vector<1x8x32xf32> to vector<1x8x8xf32>
    %52 = arith.truncf %51 : vector<1x8x8xf32> to vector<1x8x8xbf16>
    "tpu.trace_start"() <{level = 10 : i32, message = "bld,bmd->blm"}> : () -> ()
    %cst_20 = arith.constant dense<0.000000e+00> : vector<1x8x8xf32>
    %53 = tpu.matmul %48, %50, %cst_20 {dimension_numbers = #tpu.dot_dimension_numbers<[2], [2], [1], [1], [0, 0, 0, 1, 1, 1], [0], [0]>} : vector<1x8x8xbf16>, vector<1x8x8xbf16>, vector<1x8x8xf32> -> vector<1x8x8xf32>
    %cst_21 = arith.constant -1.000000e+30 : f32
    "tpu.trace_stop"() : () -> ()
    %54 = vector.broadcast %cst_21 : f32 to vector<1x8x8xf32>
    %55 = arith.select %8, %53, %54 : vector<1x8x8xi1>, vector<1x8x8xf32>
    %cst_22 = arith.constant dense<0xFF800000> : vector<1x8xf32>
    %56 = vector.multi_reduction <maximumf>, %55, %cst_22 [2] : vector<1x8x8xf32> to vector<1x8xf32>
    %57 = vector.shape_cast %56 : vector<1x8xf32> to vector<1x8x1xf32>
    %58 = vector.broadcast %57 : vector<1x8x1xf32> to vector<1x8x8xf32>
    %59 = arith.subf %55, %58 : vector<1x8x8xf32>
    %60 = math.exp %59 : vector<1x8x8xf32>
    %cst_23 = arith.constant dense<0.000000e+00> : vector<1x8xf32>
    %61 = vector.multi_reduction <add>, %60, %cst_23 [2] : vector<1x8x8xf32> to vector<1x8xf32>
    %62 = vector.shape_cast %61 : vector<1x8xf32> to vector<1x8x1xf32>
    %63 = tpu.reciprocal %62 {approx = true} : vector<1x8x1xf32> -> vector<1x8x1xf32>
    %64 = vector.broadcast %63 : vector<1x8x1xf32> to vector<1x8x8xf32>
    %65 = arith.mulf %60, %64 : vector<1x8x8xf32>
    %66 = arith.truncf %65 : vector<1x8x8xf32> to vector<1x8x8xbf16>
    "tpu.trace_start"() <{level = 10 : i32, message = "blm,bmd->bld"}> : () -> ()
    %cst_24 = arith.constant dense<0.000000e+00> : vector<1x8x8xf32>
    %67 = tpu.matmul %66, %52, %cst_24 {dimension_numbers = #tpu.dot_dimension_numbers<[2], [1], [1], [2], [0, 0, 0, 1, 1, 2], [0], [0]>} : vector<1x8x8xbf16>, vector<1x8x8xbf16>, vector<1x8x8xf32> -> vector<1x8x8xf32>
    "tpu.trace_stop"() : () -> ()
    %68 = vector.extract_strided_slice %44 {offsets = [0, 0, 8], sizes = [1, 8, 8], strides = [1, 1, 1]} : vector<1x8x32xf32> to vector<1x8x8xf32>
    %69 = arith.truncf %68 : vector<1x8x8xf32> to vector<1x8x8xbf16>
    %70 = vector.extract_strided_slice %45 {offsets = [0, 0, 8], sizes = [1, 8, 8], strides = [1, 1, 1]} : vector<1x8x32xf32> to vector<1x8x8xf32>
    %71 = arith.truncf %70 : vector<1x8x8xf32> to vector<1x8x8xbf16>
    %72 = vector.extract_strided_slice %46 {offsets = [0, 0, 8], sizes = [1, 8, 8], strides = [1, 1, 1]} : vector<1x8x32xf32> to vector<1x8x8xf32>
    %73 = arith.truncf %72 : vector<1x8x8xf32> to vector<1x8x8xbf16>
    "tpu.trace_start"() <{level = 10 : i32, message = "bld,bmd->blm"}> : () -> ()
    %cst_25 = arith.constant dense<0.000000e+00> : vector<1x8x8xf32>
    %74 = tpu.matmul %69, %71, %cst_25 {dimension_numbers = #tpu.dot_dimension_numbers<[2], [2], [1], [1], [0, 0, 0, 1, 1, 1], [0], [0]>} : vector<1x8x8xbf16>, vector<1x8x8xbf16>, vector<1x8x8xf32> -> vector<1x8x8xf32>
    %cst_26 = arith.constant -1.000000e+30 : f32
    "tpu.trace_stop"() : () -> ()
    %75 = vector.broadcast %cst_26 : f32 to vector<1x8x8xf32>
    %76 = arith.select %8, %74, %75 : vector<1x8x8xi1>, vector<1x8x8xf32>
    %cst_27 = arith.constant dense<0xFF800000> : vector<1x8xf32>
    %77 = vector.multi_reduction <maximumf>, %76, %cst_27 [2] : vector<1x8x8xf32> to vector<1x8xf32>
    %78 = vector.shape_cast %77 : vector<1x8xf32> to vector<1x8x1xf32>
    %79 = vector.broadcast %78 : vector<1x8x1xf32> to vector<1x8x8xf32>
    %80 = arith.subf %76, %79 : vector<1x8x8xf32>
    %81 = math.exp %80 : vector<1x8x8xf32>
    %cst_28 = arith.constant dense<0.000000e+00> : vector<1x8xf32>
    %82 = vector.multi_reduction <add>, %81, %cst_28 [2] : vector<1x8x8xf32> to vector<1x8xf32>
    %83 = vector.shape_cast %82 : vector<1x8xf32> to vector<1x8x1xf32>
    %84 = tpu.reciprocal %83 {approx = true} : vector<1x8x1xf32> -> vector<1x8x1xf32>
    %85 = vector.broadcast %84 : vector<1x8x1xf32> to vector<1x8x8xf32>
    %86 = arith.mulf %81, %85 : vector<1x8x8xf32>
    %87 = arith.truncf %86 : vector<1x8x8xf32> to vector<1x8x8xbf16>
    "tpu.trace_start"() <{level = 10 : i32, message = "blm,bmd->bld"}> : () -> ()
    %cst_29 = arith.constant dense<0.000000e+00> : vector<1x8x8xf32>
    %88 = tpu.matmul %87, %73, %cst_29 {dimension_numbers = #tpu.dot_dimension_numbers<[2], [1], [1], [2], [0, 0, 0, 1, 1, 2], [0], [0]>} : vector<1x8x8xbf16>, vector<1x8x8xbf16>, vector<1x8x8xf32> -> vector<1x8x8xf32>
    "tpu.trace_stop"() : () -> ()
    %89 = vector.extract_strided_slice %44 {offsets = [0, 0, 16], sizes = [1, 8, 8], strides = [1, 1, 1]} : vector<1x8x32xf32> to vector<1x8x8xf32>
    %90 = arith.truncf %89 : vector<1x8x8xf32> to vector<1x8x8xbf16>
    %91 = vector.extract_strided_slice %45 {offsets = [0, 0, 16], sizes = [1, 8, 8], strides = [1, 1, 1]} : vector<1x8x32xf32> to vector<1x8x8xf32>
    %92 = arith.truncf %91 : vector<1x8x8xf32> to vector<1x8x8xbf16>
    %93 = vector.extract_strided_slice %46 {offsets = [0, 0, 16], sizes = [1, 8, 8], strides = [1, 1, 1]} : vector<1x8x32xf32> to vector<1x8x8xf32>
    %94 = arith.truncf %93 : vector<1x8x8xf32> to vector<1x8x8xbf16>
    "tpu.trace_start"() <{level = 10 : i32, message = "bld,bmd->blm"}> : () -> ()
    %cst_30 = arith.constant dense<0.000000e+00> : vector<1x8x8xf32>
    %95 = tpu.matmul %90, %92, %cst_30 {dimension_numbers = #tpu.dot_dimension_numbers<[2], [2], [1], [1], [0, 0, 0, 1, 1, 1], [0], [0]>} : vector<1x8x8xbf16>, vector<1x8x8xbf16>, vector<1x8x8xf32> -> vector<1x8x8xf32>
    %cst_31 = arith.constant -1.000000e+30 : f32
    "tpu.trace_stop"() : () -> ()
    %96 = vector.broadcast %cst_31 : f32 to vector<1x8x8xf32>
    %97 = arith.select %8, %95, %96 : vector<1x8x8xi1>, vector<1x8x8xf32>
    %cst_32 = arith.constant dense<0xFF800000> : vector<1x8xf32>
    %98 = vector.multi_reduction <maximumf>, %97, %cst_32 [2] : vector<1x8x8xf32> to vector<1x8xf32>
    %99 = vector.shape_cast %98 : vector<1x8xf32> to vector<1x8x1xf32>
    %100 = vector.broadcast %99 : vector<1x8x1xf32> to vector<1x8x8xf32>
    %101 = arith.subf %97, %100 : vector<1x8x8xf32>
    %102 = math.exp %101 : vector<1x8x8xf32>
    %cst_33 = arith.constant dense<0.000000e+00> : vector<1x8xf32>
    %103 = vector.multi_reduction <add>, %102, %cst_33 [2] : vector<1x8x8xf32> to vector<1x8xf32>
    %104 = vector.shape_cast %103 : vector<1x8xf32> to vector<1x8x1xf32>
    %105 = tpu.reciprocal %104 {approx = true} : vector<1x8x1xf32> -> vector<1x8x1xf32>
    %106 = vector.broadcast %105 : vector<1x8x1xf32> to vector<1x8x8xf32>
    %107 = arith.mulf %102, %106 : vector<1x8x8xf32>
    %108 = arith.truncf %107 : vector<1x8x8xf32> to vector<1x8x8xbf16>
    "tpu.trace_start"() <{level = 10 : i32, message = "blm,bmd->bld"}> : () -> ()
    %cst_34 = arith.constant dense<0.000000e+00> : vector<1x8x8xf32>
    %109 = tpu.matmul %108, %94, %cst_34 {dimension_numbers = #tpu.dot_dimension_numbers<[2], [1], [1], [2], [0, 0, 0, 1, 1, 2], [0], [0]>} : vector<1x8x8xbf16>, vector<1x8x8xbf16>, vector<1x8x8xf32> -> vector<1x8x8xf32>
    "tpu.trace_stop"() : () -> ()
    %110 = vector.extract_strided_slice %44 {offsets = [0, 0, 24], sizes = [1, 8, 8], strides = [1, 1, 1]} : vector<1x8x32xf32> to vector<1x8x8xf32>
    %111 = arith.truncf %110 : vector<1x8x8xf32> to vector<1x8x8xbf16>
    %112 = vector.extract_strided_slice %45 {offsets = [0, 0, 24], sizes = [1, 8, 8], strides = [1, 1, 1]} : vector<1x8x32xf32> to vector<1x8x8xf32>
    %113 = arith.truncf %112 : vector<1x8x8xf32> to vector<1x8x8xbf16>
    %114 = vector.extract_strided_slice %46 {offsets = [0, 0, 24], sizes = [1, 8, 8], strides = [1, 1, 1]} : vector<1x8x32xf32> to vector<1x8x8xf32>
    %115 = arith.truncf %114 : vector<1x8x8xf32> to vector<1x8x8xbf16>
    "tpu.trace_start"() <{level = 10 : i32, message = "bld,bmd->blm"}> : () -> ()
    %cst_35 = arith.constant dense<0.000000e+00> : vector<1x8x8xf32>
    %116 = tpu.matmul %111, %113, %cst_35 {dimension_numbers = #tpu.dot_dimension_numbers<[2], [2], [1], [1], [0, 0, 0, 1, 1, 1], [0], [0]>} : vector<1x8x8xbf16>, vector<1x8x8xbf16>, vector<1x8x8xf32> -> vector<1x8x8xf32>
    %cst_36 = arith.constant -1.000000e+30 : f32
    "tpu.trace_stop"() : () -> ()
    %117 = vector.broadcast %cst_36 : f32 to vector<1x8x8xf32>
    %118 = arith.select %8, %116, %117 : vector<1x8x8xi1>, vector<1x8x8xf32>
    %cst_37 = arith.constant dense<0xFF800000> : vector<1x8xf32>
    %119 = vector.multi_reduction <maximumf>, %118, %cst_37 [2] : vector<1x8x8xf32> to vector<1x8xf32>
    %120 = vector.shape_cast %119 : vector<1x8xf32> to vector<1x8x1xf32>
    %121 = vector.broadcast %120 : vector<1x8x1xf32> to vector<1x8x8xf32>
    %122 = arith.subf %118, %121 : vector<1x8x8xf32>
    %123 = math.exp %122 : vector<1x8x8xf32>
    %cst_38 = arith.constant dense<0.000000e+00> : vector<1x8xf32>
    %124 = vector.multi_reduction <add>, %123, %cst_38 [2] : vector<1x8x8xf32> to vector<1x8xf32>
    %125 = vector.shape_cast %124 : vector<1x8xf32> to vector<1x8x1xf32>
    %126 = tpu.reciprocal %125 {approx = true} : vector<1x8x1xf32> -> vector<1x8x1xf32>
    %127 = vector.broadcast %126 : vector<1x8x1xf32> to vector<1x8x8xf32>
    %128 = arith.mulf %123, %127 : vector<1x8x8xf32>
    %129 = arith.truncf %128 : vector<1x8x8xf32> to vector<1x8x8xbf16>
    "tpu.trace_start"() <{level = 10 : i32, message = "blm,bmd->bld"}> : () -> ()
    %cst_39 = arith.constant dense<0.000000e+00> : vector<1x8x8xf32>
    %130 = tpu.matmul %129, %115, %cst_39 {dimension_numbers = #tpu.dot_dimension_numbers<[2], [1], [1], [2], [0, 0, 0, 1, 1, 2], [0], [0]>} : vector<1x8x8xbf16>, vector<1x8x8xbf16>, vector<1x8x8xf32> -> vector<1x8x8xf32>
    "tpu.trace_stop"() : () -> ()
    %131 = tpu.concatenate %67, %88, %109, %130 in 2 : vector<1x8x8xf32>, vector<1x8x8xf32>, vector<1x8x8xf32>, vector<1x8x8xf32> -> vector<1x8x32xf32>
    %132 = vector.shape_cast %131 : vector<1x8x32xf32> to vector<8x32xf32>
    %133 = arith.truncf %132 : vector<8x32xf32> to vector<8x32xbf16>
    %c0_40 = arith.constant 0 : index
    %c0_41 = arith.constant 0 : index
    %c0_42 = arith.constant 0 : index
    %134 = vector.load %arg9[%c0_40, %c0_41, %c0_42] : memref<1x32x32xbf16, #tpu.memory_space<vmem>>, vector<1x32x32xbf16>
    %135 = vector.shape_cast %134 : vector<1x32x32xbf16> to vector<32x32xbf16>
    %cst_43 = arith.constant dense<0.000000e+00> : vector<8x32xf32>
    %136 = tpu.matmul %133, %135, %cst_43 {dimension_numbers = #tpu.dot_dimension_numbers<[1], [0], [0], [1], [0, 0, 1, 1], [], []>} : vector<8x32xbf16>, vector<32x32xbf16>, vector<8x32xf32> -> vector<8x32xf32>
    %c0_44 = arith.constant 0 : index
    %c0_45 = arith.constant 0 : index
    %c0_46 = arith.constant 0 : index
    %137 = vector.load %arg10[%c0_44, %c0_45, %c0_46] : memref<1x1x32xf32, #tpu.memory_space<vmem>>, vector<1x1x32xf32>
    %138 = vector.shape_cast %137 : vector<1x1x32xf32> to vector<1x32xf32>
    %139 = vector.broadcast %138 : vector<1x32xf32> to vector<8x32xf32>
    %140 = arith.addf %136, %139 : vector<8x32xf32>
    %141 = arith.addf %4, %140 : vector<8x32xf32>
    %c0_47 = arith.constant 0 : index
    %c0_48 = arith.constant 0 : index
    %c0_49 = arith.constant 0 : index
    %142 = vector.load %arg11[%c0_47, %c0_48, %c0_49] : memref<1x1x32xf32, #tpu.memory_space<vmem>>, vector<1x1x32xf32>
    %143 = vector.shape_cast %142 : vector<1x1x32xf32> to vector<1x32xf32>
    %c0_50 = arith.constant 0 : index
    %c0_51 = arith.constant 0 : index
    %c0_52 = arith.constant 0 : index
    %144 = vector.load %arg12[%c0_50, %c0_51, %c0_52] : memref<1x1x32xf32, #tpu.memory_space<vmem>>, vector<1x1x32xf32>
    %145 = vector.shape_cast %144 : vector<1x1x32xf32> to vector<1x32xf32>
    %cst_53 = arith.constant dense<0.000000e+00> : vector<8xf32>
    %146 = vector.multi_reduction <add>, %141, %cst_53 [1] : vector<8x32xf32> to vector<8xf32>
    %147 = vector.shape_cast %146 : vector<8xf32> to vector<8x1xf32>
    %cst_54 = arith.constant 3.200000e+01 : f32
    %148 = vector.broadcast %cst_54 : f32 to vector<8x1xf32>
    %149 = arith.divf %147, %148 : vector<8x1xf32>
    %150 = vector.broadcast %149 : vector<8x1xf32> to vector<8x32xf32>
    %151 = arith.subf %141, %150 : vector<8x32xf32>
    %152 = arith.mulf %151, %151 : vector<8x32xf32>
    %cst_55 = arith.constant dense<0.000000e+00> : vector<8xf32>
    %153 = vector.multi_reduction <add>, %152, %cst_55 [1] : vector<8x32xf32> to vector<8xf32>
    %154 = vector.shape_cast %153 : vector<8xf32> to vector<8x1xf32>
    %cst_56 = arith.constant 3.200000e+01 : f32
    %155 = vector.broadcast %cst_56 : f32 to vector<8x1xf32>
    %156 = arith.divf %154, %155 : vector<8x1xf32>
    %157 = vector.broadcast %149 : vector<8x1xf32> to vector<8x32xf32>
    %158 = arith.subf %141, %157 : vector<8x32xf32>
    %cst_57 = arith.constant 9.99999974E-6 : f32
    %159 = vector.broadcast %cst_57 : f32 to vector<8x1xf32>
    %160 = arith.addf %156, %159 : vector<8x1xf32>
    %161 = math.rsqrt %160 : vector<8x1xf32>
    %162 = vector.broadcast %161 : vector<8x1xf32> to vector<8x32xf32>
    %163 = arith.mulf %158, %162 : vector<8x32xf32>
    %164 = vector.broadcast %143 : vector<1x32xf32> to vector<8x32xf32>
    %165 = arith.mulf %163, %164 : vector<8x32xf32>
    %166 = vector.broadcast %145 : vector<1x32xf32> to vector<8x32xf32>
    %167 = arith.addf %165, %166 : vector<8x32xf32>
    %168 = arith.truncf %167 : vector<8x32xf32> to vector<8x32xbf16>
    %cst_58 = arith.constant 0.000000e+00 : f32
    %169 = vector.broadcast %cst_58 : f32 to vector<8x32xf32>
    %c0_59 = arith.constant 0 : index
    %c0_60 = arith.constant 0 : index
    %c0_61 = arith.constant 0 : index
    %170 = vector.load %arg16[%c0_59, %c0_60, %c0_61] : memref<1x1x32xf32, #tpu.memory_space<vmem>>, vector<1x1x32xf32>
    %171 = vector.shape_cast %170 : vector<1x1x32xf32> to vector<1x32xf32>
    %172 = vector.broadcast %171 : vector<1x32xf32> to vector<8x32xf32>
    %173 = arith.addf %169, %172 : vector<8x32xf32>
    %c0_62 = arith.constant 0 : index
    %c0_63 = arith.constant 0 : index
    %c0_64 = arith.constant 0 : index
    %174 = vector.load %arg13[%c0_62, %c0_63, %c0_64] : memref<1x32x128xbf16, #tpu.memory_space<vmem>>, vector<1x32x128xbf16>
    %175 = vector.shape_cast %174 : vector<1x32x128xbf16> to vector<32x128xbf16>
    %cst_65 = arith.constant dense<0.000000e+00> : vector<8x128xf32>
    %176 = tpu.matmul %168, %175, %cst_65 {dimension_numbers = #tpu.dot_dimension_numbers<[1], [0], [0], [1], [0, 0, 1, 1], [], []>} : vector<8x32xbf16>, vector<32x128xbf16>, vector<8x128xf32> -> vector<8x128xf32>
    %c0_66 = arith.constant 0 : index
    %c0_67 = arith.constant 0 : index
    %c0_68 = arith.constant 0 : index
    %177 = vector.load %arg14[%c0_66, %c0_67, %c0_68] : memref<1x1x128xf32, #tpu.memory_space<vmem>>, vector<1x1x128xf32>
    %178 = vector.shape_cast %177 : vector<1x1x128xf32> to vector<1x128xf32>
    %179 = vector.broadcast %178 : vector<1x128xf32> to vector<8x128xf32>
    %180 = arith.addf %176, %179 : vector<8x128xf32>
    %cst_69 = arith.constant 1.702000e+00 : f32
    %181 = vector.broadcast %cst_69 : f32 to vector<8x128xf32>
    %182 = arith.mulf %181, %180 : vector<8x128xf32>
    %183 = arith.negf %182 : vector<8x128xf32>
    %184 = math.exp %183 : vector<8x128xf32>
    %cst_70 = arith.constant 1.000000e+00 : f32
    %185 = vector.broadcast %cst_70 : f32 to vector<8x128xf32>
    %186 = arith.addf %185, %184 : vector<8x128xf32>
    %187 = arith.divf %185, %186 : vector<8x128xf32>
    %188 = arith.mulf %180, %187 : vector<8x128xf32>
    %189 = arith.truncf %188 : vector<8x128xf32> to vector<8x128xbf16>
    %c0_71 = arith.constant 0 : index
    %c0_72 = arith.constant 0 : index
    %c0_73 = arith.constant 0 : index
    %190 = vector.load %arg15[%c0_71, %c0_72, %c0_73] : memref<1x128x32xbf16, #tpu.memory_space<vmem>>, vector<1x128x32xbf16>
    %191 = vector.shape_cast %190 : vector<1x128x32xbf16> to vector<128x32xbf16>
    %cst_74 = arith.constant dense<0.000000e+00> : vector<8x32xf32>
    %192 = tpu.matmul %189, %191, %cst_74 {dimension_numbers = #tpu.dot_dimension_numbers<[1], [0], [0], [1], [0, 0, 1, 1], [], []>} : vector<8x128xbf16>, vector<128x32xbf16>, vector<8x32xf32> -> vector<8x32xf32>
    %193 = arith.addf %173, %192 : vector<8x32xf32>
    %194 = arith.addf %141, %193 : vector<8x32xf32>
    %195 = vector.shape_cast %194 : vector<8x32xf32> to vector<1x8x32xf32>
    %c0_75 = arith.constant 0 : index
    %c0_76 = arith.constant 0 : index
    %c0_77 = arith.constant 0 : index
    %196 = vector.load %arg21[%c0_75, %c0_76, %c0_77] : memref<1x8x32xf32, #tpu.memory_space<vmem>>, vector<1x8x32xf32>
    tpu.vector_store %arg21[%c0_75, %c0_76, %c0_77], %195 {strides = array<i32>} : memref<1x8x32xf32, #tpu.memory_space<vmem>>, vector<1x8x32xf32>,
    %c1_i32 = arith.constant 1 : i32
    %197 = arith.cmpi eq, %arg1, %c1_i32 : i32
    %198 = arith.extui %197 : i1 to i32
    %c0_i32_78 = arith.constant 0 : i32
    %199 = arith.cmpi ne, %198, %c0_i32_78 : i32
    scf.if %199 {
      %c0_79 = arith.constant 0 : index
      %c0_80 = arith.constant 0 : index
      %200 = vector.load %arg17[%c0_79, %c0_80] : memref<1x32xf32, #tpu.memory_space<vmem>>, vector<1x32xf32>
      %c0_81 = arith.constant 0 : index
      %c0_82 = arith.constant 0 : index
      %201 = vector.load %arg18[%c0_81, %c0_82] : memref<1x32xf32, #tpu.memory_space<vmem>>, vector<1x32xf32>
      %cst_83 = arith.constant dense<0.000000e+00> : vector<8xf32>
      %202 = vector.multi_reduction <add>, %194, %cst_83 [1] : vector<8x32xf32> to vector<8xf32>
      %203 = vector.shape_cast %202 : vector<8xf32> to vector<8x1xf32>
      %cst_84 = arith.constant 3.200000e+01 : f32
      %204 = vector.broadcast %cst_84 : f32 to vector<8x1xf32>
      %205 = arith.divf %203, %204 : vector<8x1xf32>
      %206 = vector.broadcast %205 : vector<8x1xf32> to vector<8x32xf32>
      %207 = arith.subf %194, %206 : vector<8x32xf32>
      %208 = arith.mulf %207, %207 : vector<8x32xf32>
      %cst_85 = arith.constant dense<0.000000e+00> : vector<8xf32>
      %209 = vector.multi_reduction <add>, %208, %cst_85 [1] : vector<8x32xf32> to vector<8xf32>
      %210 = vector.shape_cast %209 : vector<8xf32> to vector<8x1xf32>
      %cst_86 = arith.constant 3.200000e+01 : f32
      %211 = vector.broadcast %cst_86 : f32 to vector<8x1xf32>
      %212 = arith.divf %210, %211 : vector<8x1xf32>
      %213 = vector.broadcast %205 : vector<8x1xf32> to vector<8x32xf32>
      %214 = arith.subf %194, %213 : vector<8x32xf32>
      %cst_87 = arith.constant 9.99999974E-6 : f32
      %215 = vector.broadcast %cst_87 : f32 to vector<8x1xf32>
      %216 = arith.addf %212, %215 : vector<8x1xf32>
      %217 = math.rsqrt %216 : vector<8x1xf32>
      %218 = vector.broadcast %217 : vector<8x1xf32> to vector<8x32xf32>
      %219 = arith.mulf %214, %218 : vector<8x32xf32>
      %220 = vector.broadcast %200 : vector<1x32xf32> to vector<8x32xf32>
      %221 = arith.mulf %219, %220 : vector<8x32xf32>
      %222 = vector.broadcast %201 : vector<1x32xf32> to vector<8x32xf32>
      %223 = arith.addf %221, %222 : vector<8x32xf32>
      %224 = vector.shape_cast %223 : vector<8x32xf32> to vector<1x8x32xf32>
      %c0_88 = arith.constant 0 : index
      %c0_89 = arith.constant 0 : index
      %c0_90 = arith.constant 0 : index
      %225 = vector.load %arg4[%c0_88, %c0_89, %c0_90] : memref<1x1x8xf32, #tpu.memory_space<vmem>>, vector<1x1x8xf32>
      "tpu.trace_start"() <{level = 10 : i32, message = "bql,bld->bqd"}> : () -> ()
      %cst_91 = arith.constant dense<0.000000e+00> : vector<1x1x32xf32>
      %226 = tpu.matmul %225, %224, %cst_91 {dimension_numbers = #tpu.dot_dimension_numbers<[2], [1], [1], [2], [0, 0, 0, 1, 1, 2], [0], [0]>} : vector<1x1x8xf32>, vector<1x8x32xf32>, vector<1x1x32xf32> -> vector<1x1x32xf32>
      "tpu.trace_stop"() : () -> ()
      %227 = vector.shape_cast %226 : vector<1x1x32xf32> to vector<1x32xf32>
      %228 = arith.truncf %227 : vector<1x32xf32> to vector<1x32xbf16>
      %c0_92 = arith.constant 0 : index
      %c0_93 = arith.constant 0 : index
      %229 = vector.load %arg19[%c0_92, %c0_93] : memref<32x128xbf16, #tpu.memory_space<vmem>>, vector<32x128xbf16>
      %cst_94 = arith.constant dense<0.000000e+00> : vector<1x128xf32>
      %230 = tpu.matmul %228, %229, %cst_94 {dimension_numbers = #tpu.dot_dimension_numbers<[1], [0], [0], [1], [0, 0, 1, 1], [], []>} : vector<1x32xbf16>, vector<32x128xbf16>, vector<1x128xf32> -> vector<1x128xf32>
      %231 = vector.shape_cast %230 : vector<1x128xf32> to vector<1x1x128xf32>
      %c0_95 = arith.constant 0 : index
      %c0_96 = arith.constant 0 : index
      %c0_97 = arith.constant 0 : index
      %232 = vector.load %arg20[%c0_95, %c0_96, %c0_97] : memref<1x1x128xf32, #tpu.memory_space<vmem>>, vector<1x1x128xf32>
      tpu.vector_store %arg20[%c0_95, %c0_96, %c0_97], %231 {strides = array<i32>} : memref<1x1x128xf32, #tpu.memory_space<vmem>>, vector<1x1x128xf32>,
    } else {
    }
    return
  }
  func.func @transform_0(%arg0: i32, %arg1: i32) -> (i32, i32, i32) {
    %c0_i32 = arith.constant 0 : i32
    %c0_i32_0 = arith.constant 0 : i32
    %c0_i32_1 = arith.constant 0 : i32
    return %arg0, %c0_i32, %c0_i32_0 : i32, i32, i32
  }
  func.func @transform_1(%arg0: i32, %arg1: i32) -> (i32, i32) {
    %c0_i32 = arith.constant 0 : i32
    %c0_i32_0 = arith.constant 0 : i32
    %c0_i32_1 = arith.constant 0 : i32
    return %c0_i32, %c0_i32_0 : i32, i32
  }
  func.func @transform_2(%arg0: i32, %arg1: i32) -> (i32, i32, i32) {
    %c0_i32 = arith.constant 0 : i32
    %c0_i32_0 = arith.constant 0 : i32
    %c0_i32_1 = arith.constant 0 : i32
    return %arg0, %c0_i32, %c0_i32_0 : i32, i32, i32
  }
  func.func @transform_3(%arg0: i32, %arg1: i32) -> (i32, i32, i32) {
    %c0_i32 = arith.constant 0 : i32
    %c0_i32_0 = arith.constant 0 : i32
    %c0_i32_1 = arith.constant 0 : i32
    return %arg1, %c0_i32, %c0_i32_0 : i32, i32, i32
  }
  func.func @transform_4(%arg0: i32, %arg1: i32) -> (i32, i32, i32) {
    %c0_i32 = arith.constant 0 : i32
    %c0_i32_0 = arith.constant 0 : i32
    %c0_i32_1 = arith.constant 0 : i32
    return %arg1, %c0_i32, %c0_i32_0 : i32, i32, i32
  }
  func.func @transform_5(%arg0: i32, %arg1: i32) -> (i32, i32, i32) {
    %c0_i32 = arith.constant 0 : i32
    %c0_i32_0 = arith.constant 0 : i32
    %c0_i32_1 = arith.constant 0 : i32
    return %arg1, %c0_i32, %c0_i32_0 : i32, i32, i32
  }
  func.func @transform_6(%arg0: i32, %arg1: i32) -> (i32, i32, i32) {
    %c0_i32 = arith.constant 0 : i32
    %c0_i32_0 = arith.constant 0 : i32
    %c0_i32_1 = arith.constant 0 : i32
    return %arg1, %c0_i32, %c0_i32_0 : i32, i32, i32
  }
  func.func @transform_7(%arg0: i32, %arg1: i32) -> (i32, i32, i32) {
    %c0_i32 = arith.constant 0 : i32
    %c0_i32_0 = arith.constant 0 : i32
    %c0_i32_1 = arith.constant 0 : i32
    return %arg1, %c0_i32, %c0_i32_0 : i32, i32, i32
  }
  func.func @transform_8(%arg0: i32, %arg1: i32) -> (i32, i32, i32) {
    %c0_i32 = arith.constant 0 : i32
    %c0_i32_0 = arith.constant 0 : i32
    %c0_i32_1 = arith.constant 0 : i32
    return %arg1, %c0_i32, %c0_i32_0 : i32, i32, i32
  }
  func.func @transform_9(%arg0: i32, %arg1: i32) -> (i32, i32, i32) {
    %c0_i32 = arith.constant 0 : i32
    %c0_i32_0 = arith.constant 0 : i32
    %c0_i32_1 = arith.constant 0 : i32
    return %arg1, %c0_i32, %c0_i32_0 : i32, i32, i32
  }
  func.func @transform_10(%arg0: i32, %arg1: i32) -> (i32, i32, i32) {
    %c0_i32 = arith.constant 0 : i32
    %c0_i32_0 = arith.constant 0 : i32
    %c0_i32_1 = arith.constant 0 : i32
    return %arg1, %c0_i32, %c0_i32_0 : i32, i32, i32
  }
  func.func @transform_11(%arg0: i32, %arg1: i32) -> (i32, i32, i32) {
    %c0_i32 = arith.constant 0 : i32
    %c0_i32_0 = arith.constant 0 : i32
    %c0_i32_1 = arith.constant 0 : i32
    return %arg1, %c0_i32, %c0_i32_0 : i32, i32, i32
  }
  func.func @transform_12(%arg0: i32, %arg1: i32) -> (i32, i32, i32) {
    %c0_i32 = arith.constant 0 : i32
    %c0_i32_0 = arith.constant 0 : i32
    %c0_i32_1 = arith.constant 0 : i32
    return %arg1, %c0_i32, %c0_i32_0 : i32, i32, i32
  }
  func.func @transform_13(%arg0: i32, %arg1: i32) -> (i32, i32, i32) {
    %c0_i32 = arith.constant 0 : i32
    %c0_i32_0 = arith.constant 0 : i32
    %c0_i32_1 = arith.constant 0 : i32
    return %arg1, %c0_i32, %c0_i32_0 : i32, i32, i32
  }
  func.func @transform_14(%arg0: i32, %arg1: i32) -> (i32, i32, i32) {
    %c0_i32 = arith.constant 0 : i32
    %c0_i32_0 = arith.constant 0 : i32
    %c0_i32_1 = arith.constant 0 : i32
    return %arg1, %c0_i32, %c0_i32_0 : i32, i32, i32
  }
  func.func @transform_15(%arg0: i32, %arg1: i32) -> (i32, i32) {
    %c0_i32 = arith.constant 0 : i32
    %c0_i32_0 = arith.constant 0 : i32
    %c0_i32_1 = arith.constant 0 : i32
    return %c0_i32, %c0_i32_0 : i32, i32
  }
  func.func @transform_16(%arg0: i32, %arg1: i32) -> (i32, i32) {
    %c0_i32 = arith.constant 0 : i32
    %c0_i32_0 = arith.constant 0 : i32
    %c0_i32_1 = arith.constant 0 : i32
    return %c0_i32, %c0_i32_0 : i32, i32
  }
  func.func @transform_17(%arg0: i32, %arg1: i32) -> (i32, i32) {
    %c0_i32 = arith.constant 0 : i32
    %c0_i32_0 = arith.constant 0 : i32
    %c0_i32_1 = arith.constant 0 : i32
    return %c0_i32, %c0_i32_0 : i32, i32
  }
  func.func @transform_18(%arg0: i32, %arg1: i32) -> (i32, i32, i32) {
    %c0_i32 = arith.constant 0 : i32
    %c0_i32_0 = arith.constant 0 : i32
    %c0_i32_1 = arith.constant 0 : i32
    return %arg0, %c0_i32, %c0_i32_0 : i32, i32, i32
  }
}

</mosaic_0001>

<llo_original>
// kernel: tpu_custom_call.1
$region0: #{tpu_custom_call.1}
  #allocation0 [shape = 'u32[]', space=smem, size = 0x4, offset = 0x4, fixed_abs, tag = 'smem constant byte address 0x4 - core index']
  #allocation1 [shape = 'u32[144,128]{1,0:T(1,128)}', space=vmem, size = 0x12000, scoped, tag = 'internal scratch']
  #allocation2 [shape = 'f32[1,8,32]{2,1,0:T(8,128)}', space=vmem, size = 0x1000, scoped, tag = 'scratch operand']
  %s0 = inlined_call_operand.vmem [shape: f32[2,8,32], index: 0, kind: input, shape index: {}]
  %s1 = inlined_call_operand.vmem [shape: f32[8,32], index: 1, kind: input, shape index: {}]
  %s2 = inlined_call_operand.vmem [shape: f32[2,1,8], index: 2, kind: input, shape index: {}]
  %s3 = inlined_call_operand.vmem [shape: f32[2,1,32], index: 3, kind: input, shape index: {}]
  %s4 = inlined_call_operand.vmem [shape: f32[2,1,32], index: 4, kind: input, shape index: {}]
  %s5 = inlined_call_operand.vmem [shape: bf16[2,32,96], index: 5, kind: input, shape index: {}]
  %s6 = inlined_call_operand.vmem [shape: f32[2,1,96], index: 6, kind: input, shape index: {}]
  %s7 = inlined_call_operand.vmem [shape: bf16[2,32,32], index: 7, kind: input, shape index: {}]
  %s8 = inlined_call_operand.vmem [shape: f32[2,1,32], index: 8, kind: input, shape index: {}]
  %s9 = inlined_call_operand.vmem [shape: f32[2,1,32], index: 9, kind: input, shape index: {}]
  %s10 = inlined_call_operand.vmem [shape: f32[2,1,32], index: 10, kind: input, shape index: {}]
  %s11 = inlined_call_operand.vmem [shape: bf16[2,32,128], index: 11, kind: input, shape index: {}]
  %s12 = inlined_call_operand.vmem [shape: f32[2,1,128], index: 12, kind: input, shape index: {}]
  %s13 = inlined_call_operand.vmem [shape: bf16[2,128,32], index: 13, kind: input, shape index: {}]
  %s14 = inlined_call_operand.vmem [shape: f32[2,1,32], index: 14, kind: input, shape index: {}]
  %s15 = inlined_call_operand.vmem [shape: f32[1,32], index: 15, kind: input, shape index: {}]
  %s16 = inlined_call_operand.vmem [shape: f32[1,32], index: 16, kind: input, shape index: {}]
  %s17 = inlined_call_operand.vmem [shape: bf16[32,128], index: 17, kind: input, shape index: {}]
  %s18 = inlined_call_operand.hbm [shape: f32[2,1,128], index: 18, kind: output, shape index: {}]
  %s19 = sld [smem:[#allocation0]]
  $region113: #{tpu_custom_call.1} parent=0
    _
  %s21 = ssub.s32 1, %s19
  %s22 = scalar_select 0, %s21, %s19
  $region1: #{tpu_custom_call.1} parent=0
    #allocation3 [shape = 'u8[1024]{0}', space=vmem, size = 0x400, scoped, tag = 'output window, operand 0']
    #allocation4 [shape = 's32[2]{0}', space=sflag, size = 0x8, scoped, tag = 'scoped memory for tpu_custom_call.1']
    %23 = vsyncpa [#allocation4], 0
    %s24 = scalar_lea.sflag [#allocation4], 1
    %25 = vsyncpa %s24, 0
    loop: start=0, step=1, limit=6
    $region2: #{tpu_custom_call.1} parent=1 // loop_pre_header
      _
    $region3: #{tpu_custom_call.1} parent=1 // loop_header
      %s27 = sphi 0, %s31
      %p28 = scmp.ge.s32.totalorder %s27, 6
      %s34 = sphi 0, %s46
      %s35 = sphi 0, %s42
      %s36 = sphi 0, %s34
      %s37 = sphi 0, %s35
      %s38 = sphi 0, %s36
      %s39 = sphi 0, %s37
      %s49 = sphi 0, %s51
      %s52 = sphi 0, %s49
      %s53 = sphi 0, %s52
      %s69 = sphi 0, %s53
      %s73 = sphi 0, %s73
      %s75 = sphi 0, %s73
      %s76 = sphi 0, %s75
      %s90 = sphi 0, %s76
      %s96 = sphi 0, %s98
      %s99 = sphi 0, %s96
      %s100 = sphi 0, %s99
      %s116 = sphi 0, %s100
      %s122 = sphi 0, %s124
      %s125 = sphi 0, %s122
      %s126 = sphi 0, %s125
      %s142 = sphi 0, %s126
      %s148 = sphi 0, %s150
      %s151 = sphi 0, %s148
      %s152 = sphi 0, %s151
      %s168 = sphi 0, %s152
      %s174 = sphi 0, %s176
      %s177 = sphi 0, %s174
      %s178 = sphi 0, %s177
      %s194 = sphi 0, %s178
      %s200 = sphi 0, %s202
      %s203 = sphi 0, %s200
      %s204 = sphi 0, %s203
      %s220 = sphi 0, %s204
      %s226 = sphi 0, %s228
      %s229 = sphi 0, %s226
      %s230 = sphi 0, %s229
      %s246 = sphi 0, %s230
      %s252 = sphi 0, %s254
      %s255 = sphi 0, %s252
      %s256 = sphi 0, %s255
      %s272 = sphi 0, %s256
      %s278 = sphi 0, %s280
      %s281 = sphi 0, %s278
      %s282 = sphi 0, %s281
      %s298 = sphi 0, %s282
      %s304 = sphi 0, %s306
      %s307 = sphi 0, %s304
      %s308 = sphi 0, %s307
      %s324 = sphi 0, %s308
      %s330 = sphi 0, %s332
      %s333 = sphi 0, %s330
      %s334 = sphi 0, %s333
      %s350 = sphi 0, %s334
      %s356 = sphi 0, %s358
      %s359 = sphi 0, %s356
      %s360 = sphi 0, %s359
      %s376 = sphi 0, %s360
      %s382 = sphi 0, %s384
      %s385 = sphi 0, %s382
      %s386 = sphi 0, %s385
      %s402 = sphi 0, %s386
      %s408 = sphi 0, %s410
      %s411 = sphi 0, %s408
      %s412 = sphi 0, %s411
      %s428 = sphi 0, %s412
      %s432 = sphi 0, %s432
      %s434 = sphi 0, %s432
      %s435 = sphi 0, %s434
      %s449 = sphi 0, %s435
      %s453 = sphi 0, %s453
      %s455 = sphi 0, %s453
      %s456 = sphi 0, %s455
      %s470 = sphi 0, %s456
      %s474 = sphi 0, %s474
      %s476 = sphi 0, %s474
      %s477 = sphi 0, %s476
      %s491 = sphi 0, %s477
      %s497 = sphi 0, %s499
      %s500 = sphi 0, %s497
      %s501 = sphi 0, %s500
      %s517 = sphi 0, %s501
    $region4: #{tpu_custom_call.1} parent=1 // loop_header_branch
      %30 = sbr.rel (%p28) target = $region8
    $region5: #{tpu_custom_call.1} parent=1 // loop_body
      %s32 = ssub.s32 %s27, 1
      %s33 = ssub.s32 %s27, 2
      %s40 = sadd.s32 1, %s35
      %p41 = scmp.ge.s32.totalorder %s40, 2
      %s42 = scalar_select %p41, 0, %s40
      %s43 = sadd.s32 1, %s34
      %s44 = scalar_select %p41, %s43, %s34
      %p45 = scmp.ge.s32.totalorder %s44, 2
      %s46 = scalar_select %p45, 0, %s44
      %s47 = ssub.s32 %s34, %s46
      %p48 = scmp.eq.s32.totalorder %s47, 0
      %s50 = sadd.s32 %s49, 1
      %s51 = scalar_select %p48, %s49, %s50
      %p54 = pneg %p48
      %p55 = scmp.eq.s32.totalorder %s27, 3
      %p56 = por %p54, %p55
      %p57 = scmp.ne.s32.totalorder %s49, %s52
      %p58 = scmp.eq.s32.totalorder %s27, 0
      %p59 = por %p57, %p58
      %p60 = scmp.ne.s32.totalorder %s49, %s52
      %p61 = scmp.eq.s32.totalorder %s32, 3
      %p62 = por %p60, %p61
      %p63 = scmp.ne.s32.totalorder %s52, %s53
      %p64 = scmp.eq.s32.totalorder %s32, 0
      %p65 = por %p63, %p64
      %p66 = scmp.ne.s32.totalorder %s52, %s53
      %p67 = scmp.eq.s32.totalorder %s33, 3
      %p68 = por %p66, %p67
      %p70 = scmp.ne.s32.totalorder %s53, %s69
      %p71 = scmp.eq.s32.totalorder %s33, 0
      %p72 = por %p70, %p71
      %s74 = sadd.s32 %s73, 1
      %p77 = scmp.eq.s32.totalorder %s27, 3
      %p78 = scmp.ne.s32.totalorder %s73, %s75
      %p79 = scmp.eq.s32.totalorder %s27, 0
      %p80 = por %p78, %p79
      %p81 = scmp.ne.s32.totalorder %s73, %s75
      %p82 = scmp.eq.s32.totalorder %s32, 3
      %p83 = por %p81, %p82
      %p84 = scmp.ne.s32.totalorder %s75, %s76
      %p85 = scmp.eq.s32.totalorder %s32, 0
      %p86 = por %p84, %p85
      %p87 = scmp.ne.s32.totalorder %s75, %s76
      %p88 = scmp.eq.s32.totalorder %s33, 3
      %p89 = por %p87, %p88
      %p91 = scmp.ne.s32.totalorder %s76, %s90
      %p92 = scmp.eq.s32.totalorder %s33, 0
      %p93 = por %p91, %p92
      %s94 = ssub.s32 %s34, %s46
      %p95 = scmp.eq.s32.totalorder %s94, 0
      %s97 = sadd.s32 %s96, 1
      %s98 = scalar_select %p95, %s96, %s97
      %p101 = pneg %p95
      %p102 = scmp.eq.s32.totalorder %s27, 3
      %p103 = por %p101, %p102
      %p104 = scmp.ne.s32.totalorder %s96, %s99
      %p105 = scmp.eq.s32.totalorder %s27, 0
      %p106 = por %p104, %p105
      %p107 = scmp.ne.s32.totalorder %s96, %s99
      %p108 = scmp.eq.s32.totalorder %s32, 3
      %p109 = por %p107, %p108
      %p110 = scmp.ne.s32.totalorder %s99, %s100
      %p111 = scmp.eq.s32.totalorder %s32, 0
      %p112 = por %p110, %p111
      %p113 = scmp.ne.s32.totalorder %s99, %s100
      %p114 = scmp.eq.s32.totalorder %s33, 3
      %p115 = por %p113, %p114
      %p117 = scmp.ne.s32.totalorder %s100, %s116
      %p118 = scmp.eq.s32.totalorder %s33, 0
      %p119 = por %p117, %p118
      %s120 = ssub.s32 %s35, %s42
      %p121 = scmp.eq.s32.totalorder %s120, 0
      %s123 = sadd.s32 %s122, 1
      %s124 = scalar_select %p121, %s122, %s123
      %p127 = pneg %p121
      %p128 = scmp.eq.s32.totalorder %s27, 3
      %p129 = por %p127, %p128
      %p130 = scmp.ne.s32.totalorder %s122, %s125
      %p131 = scmp.eq.s32.totalorder %s27, 0
      %p132 = por %p130, %p131
      %p133 = scmp.ne.s32.totalorder %s122, %s125
      %p134 = scmp.eq.s32.totalorder %s32, 3
      %p135 = por %p133, %p134
      %p136 = scmp.ne.s32.totalorder %s125, %s126
      %p137 = scmp.eq.s32.totalorder %s32, 0
      %p138 = por %p136, %p137
      %p139 = scmp.ne.s32.totalorder %s125, %s126
      %p140 = scmp.eq.s32.totalorder %s33, 3
      %p141 = por %p139, %p140
      %p143 = scmp.ne.s32.totalorder %s126, %s142
      %p144 = scmp.eq.s32.totalorder %s33, 0
      %p145 = por %p143, %p144
      %s146 = ssub.s32 %s35, %s42
      %p147 = scmp.eq.s32.totalorder %s146, 0
      %s149 = sadd.s32 %s148, 1
      %s150 = scalar_select %p147, %s148, %s149
      %p153 = pneg %p147
      %p154 = scmp.eq.s32.totalorder %s27, 3
      %p155 = por %p153, %p154
      %p156 = scmp.ne.s32.totalorder %s148, %s151
      %p157 = scmp.eq.s32.totalorder %s27, 0
      %p158 = por %p156, %p157
      %p159 = scmp.ne.s32.totalorder %s148, %s151
      %p160 = scmp.eq.s32.totalorder %s32, 3
      %p161 = por %p159, %p160
      %p162 = scmp.ne.s32.totalorder %s151, %s152
      %p163 = scmp.eq.s32.totalorder %s32, 0
      %p164 = por %p162, %p163
      %p165 = scmp.ne.s32.totalorder %s151, %s152
      %p166 = scmp.eq.s32.totalorder %s33, 3
      %p167 = por %p165, %p166
      %p169 = scmp.ne.s32.totalorder %s152, %s168
      %p170 = scmp.eq.s32.totalorder %s33, 0
      %p171 = por %p169, %p170
      %s172 = ssub.s32 %s35, %s42
      %p173 = scmp.eq.s32.totalorder %s172, 0
      %s175 = sadd.s32 %s174, 1
      %s176 = scalar_select %p173, %s174, %s175
      %p179 = pneg %p173
      %p180 = scmp.eq.s32.totalorder %s27, 3
      %p181 = por %p179, %p180
      %p182 = scmp.ne.s32.totalorder %s174, %s177
      %p183 = scmp.eq.s32.totalorder %s27, 0
      %p184 = por %p182, %p183
      %p185 = scmp.ne.s32.totalorder %s174, %s177
      %p186 = scmp.eq.s32.totalorder %s32, 3
      %p187 = por %p185, %p186
      %p188 = scmp.ne.s32.totalorder %s177, %s178
      %p189 = scmp.eq.s32.totalorder %s32, 0
      %p190 = por %p188, %p189
      %p191 = scmp.ne.s32.totalorder %s177, %s178
      %p192 = scmp.eq.s32.totalorder %s33, 3
      %p193 = por %p191, %p192
      %p195 = scmp.ne.s32.totalorder %s178, %s194
      %p196 = scmp.eq.s32.totalorder %s33, 0
      %p197 = por %p195, %p196
      %s198 = ssub.s32 %s35, %s42
      %p199 = scmp.eq.s32.totalorder %s198, 0
      %s201 = sadd.s32 %s200, 1
      %s202 = scalar_select %p199, %s200, %s201
      %p205 = pneg %p199
      %p206 = scmp.eq.s32.totalorder %s27, 3
      %p207 = por %p205, %p206
      %p208 = scmp.ne.s32.totalorder %s200, %s203
      %p209 = scmp.eq.s32.totalorder %s27, 0
      %p210 = por %p208, %p209
      %p211 = scmp.ne.s32.totalorder %s200, %s203
      %p212 = scmp.eq.s32.totalorder %s32, 3
      %p213 = por %p211, %p212
      %p214 = scmp.ne.s32.totalorder %s203, %s204
      %p215 = scmp.eq.s32.totalorder %s32, 0
      %p216 = por %p214, %p215
      %p217 = scmp.ne.s32.totalorder %s203, %s204
      %p218 = scmp.eq.s32.totalorder %s33, 3
      %p219 = por %p217, %p218
      %p221 = scmp.ne.s32.totalorder %s204, %s220
      %p222 = scmp.eq.s32.totalorder %s33, 0
      %p223 = por %p221, %p222
      %s224 = ssub.s32 %s35, %s42
      %p225 = scmp.eq.s32.totalorder %s224, 0
      %s227 = sadd.s32 %s226, 1
      %s228 = scalar_select %p225, %s226, %s227
      %p231 = pneg %p225
      %p232 = scmp.eq.s32.totalorder %s27, 3
      %p233 = por %p231, %p232
      %p234 = scmp.ne.s32.totalorder %s226, %s229
      %p235 = scmp.eq.s32.totalorder %s27, 0
      %p236 = por %p234, %p235
      %p237 = scmp.ne.s32.totalorder %s226, %s229
      %p238 = scmp.eq.s32.totalorder %s32, 3
      %p239 = por %p237, %p238
      %p240 = scmp.ne.s32.totalorder %s229, %s230
      %p241 = scmp.eq.s32.totalorder %s32, 0
      %p242 = por %p240, %p241
      %p243 = scmp.ne.s32.totalorder %s229, %s230
      %p244 = scmp.eq.s32.totalorder %s33, 3
      %p245 = por %p243, %p244
      %p247 = scmp.ne.s32.totalorder %s230, %s246
      %p248 = scmp.eq.s32.totalorder %s33, 0
      %p249 = por %p247, %p248
      %s250 = ssub.s32 %s35, %s42
      %p251 = scmp.eq.s32.totalorder %s250, 0
      %s253 = sadd.s32 %s252, 1
      %s254 = scalar_select %p251, %s252, %s253
      %p257 = pneg %p251
      %p258 = scmp.eq.s32.totalorder %s27, 3
      %p259 = por %p257, %p258
      %p260 = scmp.ne.s32.totalorder %s252, %s255
      %p261 = scmp.eq.s32.totalorder %s27, 0
      %p262 = por %p260, %p261
      %p263 = scmp.ne.s32.totalorder %s252, %s255
      %p264 = scmp.eq.s32.totalorder %s32, 3
      %p265 = por %p263, %p264
      %p266 = scmp.ne.s32.totalorder %s255, %s256
      %p267 = scmp.eq.s32.totalorder %s32, 0
      %p268 = por %p266, %p267
      %p269 = scmp.ne.s32.totalorder %s255, %s256
      %p270 = scmp.eq.s32.totalorder %s33, 3
      %p271 = por %p269, %p270
      %p273 = scmp.ne.s32.totalorder %s256, %s272
      %p274 = scmp.eq.s32.totalorder %s33, 0
      %p275 = por %p273, %p274
      %s276 = ssub.s32 %s35, %s42
      %p277 = scmp.eq.s32.totalorder %s276, 0
      %s279 = sadd.s32 %s278, 1
      %s280 = scalar_select %p277, %s278, %s279
      %p283 = pneg %p277
      %p284 = scmp.eq.s32.totalorder %s27, 3
      %p285 = por %p283, %p284
      %p286 = scmp.ne.s32.totalorder %s278, %s281
      %p287 = scmp.eq.s32.totalorder %s27, 0
      %p288 = por %p286, %p287
      %p289 = scmp.ne.s32.totalorder %s278, %s281
      %p290 = scmp.eq.s32.totalorder %s32, 3
      %p291 = por %p289, %p290
      %p292 = scmp.ne.s32.totalorder %s281, %s282
      %p293 = scmp.eq.s32.totalorder %s32, 0
      %p294 = por %p292, %p293
      %p295 = scmp.ne.s32.totalorder %s281, %s282
      %p296 = scmp.eq.s32.totalorder %s33, 3
      %p297 = por %p295, %p296
      %p299 = scmp.ne.s32.totalorder %s282, %s298
      %p300 = scmp.eq.s32.totalorder %s33, 0
      %p301 = por %p299, %p300
      %s302 = ssub.s32 %s35, %s42
      %p303 = scmp.eq.s32.totalorder %s302, 0
      %s305 = sadd.s32 %s304, 1
      %s306 = scalar_select %p303, %s304, %s305
      %p309 = pneg %p303
      %p310 = scmp.eq.s32.totalorder %s27, 3
      %p311 = por %p309, %p310
      %p312 = scmp.ne.s32.totalorder %s304, %s307
      %p313 = scmp.eq.s32.totalorder %s27, 0
      %p314 = por %p312, %p313
      %p315 = scmp.ne.s32.totalorder %s304, %s307
      %p316 = scmp.eq.s32.totalorder %s32, 3
      %p317 = por %p315, %p316
      %p318 = scmp.ne.s32.totalorder %s307, %s308
      %p319 = scmp.eq.s32.totalorder %s32, 0
      %p320 = por %p318, %p319
      %p321 = scmp.ne.s32.totalorder %s307, %s308
      %p322 = scmp.eq.s32.totalorder %s33, 3
      %p323 = por %p321, %p322
      %p325 = scmp.ne.s32.totalorder %s308, %s324
      %p326 = scmp.eq.s32.totalorder %s33, 0
      %p327 = por %p325, %p326
      %s328 = ssub.s32 %s35, %s42
      %p329 = scmp.eq.s32.totalorder %s328, 0
      %s331 = sadd.s32 %s330, 1
      %s332 = scalar_select %p329, %s330, %s331
      %p335 = pneg %p329
      %p336 = scmp.eq.s32.totalorder %s27, 3
      %p337 = por %p335, %p336
      %p338 = scmp.ne.s32.totalorder %s330, %s333
      %p339 = scmp.eq.s32.totalorder %s27, 0
      %p340 = por %p338, %p339
      %p341 = scmp.ne.s32.totalorder %s330, %s333
      %p342 = scmp.eq.s32.totalorder %s32, 3
      %p343 = por %p341, %p342
      %p344 = scmp.ne.s32.totalorder %s333, %s334
      %p345 = scmp.eq.s32.totalorder %s32, 0
      %p346 = por %p344, %p345
      %p347 = scmp.ne.s32.totalorder %s333, %s334
      %p348 = scmp.eq.s32.totalorder %s33, 3
      %p349 = por %p347, %p348
      %p351 = scmp.ne.s32.totalorder %s334, %s350
      %p352 = scmp.eq.s32.totalorder %s33, 0
      %p353 = por %p351, %p352
      %s354 = ssub.s32 %s35, %s42
      %p355 = scmp.eq.s32.totalorder %s354, 0
      %s357 = sadd.s32 %s356, 1
      %s358 = scalar_select %p355, %s356, %s357
      %p361 = pneg %p355
      %p362 = scmp.eq.s32.totalorder %s27, 3
      %p363 = por %p361, %p362
      %p364 = scmp.ne.s32.totalorder %s356, %s359
      %p365 = scmp.eq.s32.totalorder %s27, 0
      %p366 = por %p364, %p365
      %p367 = scmp.ne.s32.totalorder %s356, %s359
      %p368 = scmp.eq.s32.totalorder %s32, 3
      %p369 = por %p367, %p368
      %p370 = scmp.ne.s32.totalorder %s359, %s360
      %p371 = scmp.eq.s32.totalorder %s32, 0
      %p372 = por %p370, %p371
      %p373 = scmp.ne.s32.totalorder %s359, %s360
      %p374 = scmp.eq.s32.totalorder %s33, 3
      %p375 = por %p373, %p374
      %p377 = scmp.ne.s32.totalorder %s360, %s376
      %p378 = scmp.eq.s32.totalorder %s33, 0
      %p379 = por %p377, %p378
      %s380 = ssub.s32 %s35, %s42
      %p381 = scmp.eq.s32.totalorder %s380, 0
      %s383 = sadd.s32 %s382, 1
      %s384 = scalar_select %p381, %s382, %s383
      %p387 = pneg %p381
      %p388 = scmp.eq.s32.totalorder %s27, 3
      %p389 = por %p387, %p388
      %p390 = scmp.ne.s32.totalorder %s382, %s385
      %p391 = scmp.eq.s32.totalorder %s27, 0
      %p392 = por %p390, %p391
      %p393 = scmp.ne.s32.totalorder %s382, %s385
      %p394 = scmp.eq.s32.totalorder %s32, 3
      %p395 = por %p393, %p394
      %p396 = scmp.ne.s32.totalorder %s385, %s386
      %p397 = scmp.eq.s32.totalorder %s32, 0
      %p398 = por %p396, %p397
      %p399 = scmp.ne.s32.totalorder %s385, %s386
      %p400 = scmp.eq.s32.totalorder %s33, 3
      %p401 = por %p399, %p400
      %p403 = scmp.ne.s32.totalorder %s386, %s402
      %p404 = scmp.eq.s32.totalorder %s33, 0
      %p405 = por %p403, %p404
      %s406 = ssub.s32 %s35, %s42
      %p407 = scmp.eq.s32.totalorder %s406, 0
      %s409 = sadd.s32 %s408, 1
      %s410 = scalar_select %p407, %s408, %s409
      %p413 = pneg %p407
      %p414 = scmp.eq.s32.totalorder %s27, 3
      %p415 = por %p413, %p414
      %p416 = scmp.ne.s32.totalorder %s408, %s411
      %p417 = scmp.eq.s32.totalorder %s27, 0
      %p418 = por %p416, %p417
      %p419 = scmp.ne.s32.totalorder %s408, %s411
      %p420 = scmp.eq.s32.totalorder %s32, 3
      %p421 = por %p419, %p420
      %p422 = scmp.ne.s32.totalorder %s411, %s412
      %p423 = scmp.eq.s32.totalorder %s32, 0
      %p424 = por %p422, %p423
      %p425 = scmp.ne.s32.totalorder %s411, %s412
      %p426 = scmp.eq.s32.totalorder %s33, 3
      %p427 = por %p425, %p426
      %p429 = scmp.ne.s32.totalorder %s412, %s428
      %p430 = scmp.eq.s32.totalorder %s33, 0
      %p431 = por %p429, %p430
      %s433 = sadd.s32 %s432, 1
      %p436 = scmp.eq.s32.totalorder %s27, 3
      %p437 = scmp.ne.s32.totalorder %s432, %s434
      %p438 = scmp.eq.s32.totalorder %s27, 0
      %p439 = por %p437, %p438
      %p440 = scmp.ne.s32.totalorder %s432, %s434
      %p441 = scmp.eq.s32.totalorder %s32, 3
      %p442 = por %p440, %p441
      %p443 = scmp.ne.s32.totalorder %s434, %s435
      %p444 = scmp.eq.s32.totalorder %s32, 0
      %p445 = por %p443, %p444
      %p446 = scmp.ne.s32.totalorder %s434, %s435
      %p447 = scmp.eq.s32.totalorder %s33, 3
      %p448 = por %p446, %p447
      %p450 = scmp.ne.s32.totalorder %s435, %s449
      %p451 = scmp.eq.s32.totalorder %s33, 0
      %p452 = por %p450, %p451
      %s454 = sadd.s32 %s453, 1
      %p457 = scmp.eq.s32.totalorder %s27, 3
      %p458 = scmp.ne.s32.totalorder %s453, %s455
      %p459 = scmp.eq.s32.totalorder %s27, 0
      %p460 = por %p458, %p459
      %p461 = scmp.ne.s32.totalorder %s453, %s455
      %p462 = scmp.eq.s32.totalorder %s32, 3
      %p463 = por %p461, %p462
      %p464 = scmp.ne.s32.totalorder %s455, %s456
      %p465 = scmp.eq.s32.totalorder %s32, 0
      %p466 = por %p464, %p465
      %p467 = scmp.ne.s32.totalorder %s455, %s456
      %p468 = scmp.eq.s32.totalorder %s33, 3
      %p469 = por %p467, %p468
      %p471 = scmp.ne.s32.totalorder %s456, %s470
      %p472 = scmp.eq.s32.totalorder %s33, 0
      %p473 = por %p471, %p472
      %s475 = sadd.s32 %s474, 1
      %p478 = scmp.eq.s32.totalorder %s27, 3
      %p479 = scmp.ne.s32.totalorder %s474, %s476
      %p480 = scmp.eq.s32.totalorder %s27, 0
      %p481 = por %p479, %p480
      %p482 = scmp.ne.s32.totalorder %s474, %s476
      %p483 = scmp.eq.s32.totalorder %s32, 3
      %p484 = por %p482, %p483
      %p485 = scmp.ne.s32.totalorder %s476, %s477
      %p486 = scmp.eq.s32.totalorder %s32, 0
      %p487 = por %p485, %p486
      %p488 = scmp.ne.s32.totalorder %s476, %s477
      %p489 = scmp.eq.s32.totalorder %s33, 3
      %p490 = por %p488, %p489
      %p492 = scmp.ne.s32.totalorder %s477, %s491
      %p493 = scmp.eq.s32.totalorder %s33, 0
      %p494 = por %p492, %p493
      %s495 = ssub.s32 %s34, %s46
      %p496 = scmp.eq.s32.totalorder %s495, 0
      %s498 = sadd.s32 %s497, 1
      %s499 = scalar_select %p496, %s497, %s498
      %p502 = pneg %p496
      %p503 = scmp.eq.s32.totalorder %s27, 3
      %p504 = por %p502, %p503
      %p505 = scmp.ne.s32.totalorder %s497, %s500
      %p506 = scmp.eq.s32.totalorder %s27, 0
      %p507 = por %p505, %p506
      %p508 = scmp.ne.s32.totalorder %s497, %s500
      %p509 = scmp.eq.s32.totalorder %s32, 3
      %p510 = por %p508, %p509
      %p511 = scmp.ne.s32.totalorder %s500, %s501
      %p512 = scmp.eq.s32.totalorder %s32, 0
      %p513 = por %p511, %p512
      %p514 = scmp.ne.s32.totalorder %s500, %s501
      %p515 = scmp.eq.s32.totalorder %s33, 3
      %p516 = por %p514, %p515
      %p518 = scmp.ne.s32.totalorder %s501, %s517
      %p519 = scmp.eq.s32.totalorder %s33, 0
      %p520 = por %p518, %p519
      %p521 = scmp.le.s32.totalorder 1, %s27
      %p522 = scmp.lt.s32.totalorder %s27, 5
      %p523 = pnand %p521, %p522
      %p524 = pneg %p523
      // Predicated region
      $region9: #{tpu_custom_call.1} parent=5 // pred_check
        _
      $region10: #{tpu_custom_call.1} parent=5 // pred_check_branch
        %526 = sbr.rel (%p523) target = $region12
      $region11: #{tpu_custom_call.1} parent=5 // pred_region
        %s527 = ssub.s32 %s27, 1
        // Predicated region
        $region13: #{tpu_custom_call.1} parent=11 // pred_check
          %p528 = pneg %p86
        $region14: #{tpu_custom_call.1} parent=11 // pred_check_branch
          %530 = sbr.rel (%p528) target = $region16
        $region15: #{tpu_custom_call.1} parent=11 // pred_region
          _
        $region16: #{tpu_custom_call.1} parent=11 // pred_fallthru
          _
        // Predicated region
        $region17: #{tpu_custom_call.1} parent=11 // pred_check
          %p531 = pneg %p445
        $region18: #{tpu_custom_call.1} parent=11 // pred_check_branch
          %533 = sbr.rel (%p531) target = $region20
        $region19: #{tpu_custom_call.1} parent=11 // pred_region
          _
        $region20: #{tpu_custom_call.1} parent=11 // pred_fallthru
          _
        // Predicated region
        $region21: #{tpu_custom_call.1} parent=11 // pred_check
          %p534 = pneg %p466
        $region22: #{tpu_custom_call.1} parent=11 // pred_check_branch
          %536 = sbr.rel (%p534) target = $region24
        $region23: #{tpu_custom_call.1} parent=11 // pred_region
          _
        $region24: #{tpu_custom_call.1} parent=11 // pred_fallthru
          _
        // Predicated region
        $region25: #{tpu_custom_call.1} parent=11 // pred_check
          %p537 = pneg %p487
        $region26: #{tpu_custom_call.1} parent=11 // pred_check_branch
          %539 = sbr.rel (%p537) target = $region28
        $region27: #{tpu_custom_call.1} parent=11 // pred_region
          _
        $region28: #{tpu_custom_call.1} parent=11 // pred_fallthru
          _
      $region12: #{tpu_custom_call.1} parent=5 // pred_fallthru
        _
      %p540 = scmp.lt.s32.totalorder %s27, 4
      // Predicated region
      $region29: #{tpu_custom_call.1} parent=5 // pred_check
        %p541 = pneg %p540
      $region30: #{tpu_custom_call.1} parent=5 // pred_check_branch
        %543 = sbr.rel (%p541) target = $region32
      $region31: #{tpu_custom_call.1} parent=5 // pred_region
        // Predicated region
        $region33: #{tpu_custom_call.1} parent=31 // pred_check
          %p544 = pneg %p59
        $region34: #{tpu_custom_call.1} parent=31 // pred_check_branch
          %546 = sbr.rel (%p544) target = $region36
        $region35: #{tpu_custom_call.1} parent=31 // pred_region
          %p547 = scmp.lt.s32.totalorder %s34, 1
          %s548 = scalar_select %p547, %s34, 1
          %s549 = smul.addr %s548, 8
          %s550 = scalar_lea.vmem %s0, %s549
        $region36: #{tpu_custom_call.1} parent=31 // pred_fallthru
          _
        // Predicated region
        $region37: #{tpu_custom_call.1} parent=31 // pred_check
          %p551 = pneg %p106
        $region38: #{tpu_custom_call.1} parent=31 // pred_check_branch
          %553 = sbr.rel (%p551) target = $region40
        $region39: #{tpu_custom_call.1} parent=31 // pred_region
          %p554 = scmp.lt.s32.totalorder %s34, 1
          %s555 = scalar_select %p554, %s34, 1
          %s556 = scalar_lea.vmem %s2, %s555
        $region40: #{tpu_custom_call.1} parent=31 // pred_fallthru
          _
        // Predicated region
        $region41: #{tpu_custom_call.1} parent=31 // pred_check
          %p557 = pneg %p132
        $region42: #{tpu_custom_call.1} parent=31 // pred_check_branch
          %559 = sbr.rel (%p557) target = $region44
        $region43: #{tpu_custom_call.1} parent=31 // pred_region
          %p560 = scmp.lt.s32.totalorder %s35, 1
          %s561 = scalar_select %p560, %s35, 1
          %s562 = scalar_lea.vmem %s3, %s561
        $region44: #{tpu_custom_call.1} parent=31 // pred_fallthru
          _
        // Predicated region
        $region45: #{tpu_custom_call.1} parent=31 // pred_check
          %p563 = pneg %p158
        $region46: #{tpu_custom_call.1} parent=31 // pred_check_branch
          %565 = sbr.rel (%p563) target = $region48
        $region47: #{tpu_custom_call.1} parent=31 // pred_region
          %p566 = scmp.lt.s32.totalorder %s35, 1
          %s567 = scalar_select %p566, %s35, 1
          %s568 = scalar_lea.vmem %s4, %s567
        $region48: #{tpu_custom_call.1} parent=31 // pred_fallthru
          _
        // Predicated region
        $region49: #{tpu_custom_call.1} parent=31 // pred_check
          %p569 = pneg %p184
        $region50: #{tpu_custom_call.1} parent=31 // pred_check_branch
          %571 = sbr.rel (%p569) target = $region52
        $region51: #{tpu_custom_call.1} parent=31 // pred_region
          %p572 = scmp.lt.s32.totalorder %s35, 1
          %s573 = scalar_select %p572, %s35, 1
          %s574 = smul.addr %s573, 4
          %s575 = smul.addr %s574, 4
          %s576 = scalar_lea.vmem %s5, %s575
        $region52: #{tpu_custom_call.1} parent=31 // pred_fallthru
          _
        // Predicated region
        $region53: #{tpu_custom_call.1} parent=31 // pred_check
          %p577 = pneg %p210
        $region54: #{tpu_custom_call.1} parent=31 // pred_check_branch
          %579 = sbr.rel (%p577) target = $region56
        $region55: #{tpu_custom_call.1} parent=31 // pred_region
          %p580 = scmp.lt.s32.totalorder %s35, 1
          %s581 = scalar_select %p580, %s35, 1
          %s582 = scalar_lea.vmem %s6, %s581
        $region56: #{tpu_custom_call.1} parent=31 // pred_fallthru
          _
        // Predicated region
        $region57: #{tpu_custom_call.1} parent=31 // pred_check
          %p583 = pneg %p236
        $region58: #{tpu_custom_call.1} parent=31 // pred_check_branch
          %585 = sbr.rel (%p583) target = $region60
        $region59: #{tpu_custom_call.1} parent=31 // pred_region
          %p586 = scmp.lt.s32.totalorder %s35, 1
          %s587 = scalar_select %p586, %s35, 1
          %s588 = smul.addr %s587, 4
          %s589 = smul.addr %s588, 4
          %s590 = scalar_lea.vmem %s7, %s589
        $region60: #{tpu_custom_call.1} parent=31 // pred_fallthru
          _
        // Predicated region
        $region61: #{tpu_custom_call.1} parent=31 // pred_check
          %p591 = pneg %p262
        $region62: #{tpu_custom_call.1} parent=31 // pred_check_branch
          %593 = sbr.rel (%p591) target = $region64
        $region63: #{tpu_custom_call.1} parent=31 // pred_region
          %p594 = scmp.lt.s32.totalorder %s35, 1
          %s595 = scalar_select %p594, %s35, 1
          %s596 = scalar_lea.vmem %s8, %s595
        $region64: #{tpu_custom_call.1} parent=31 // pred_fallthru
          _
        // Predicated region
        $region65: #{tpu_custom_call.1} parent=31 // pred_check
          %p597 = pneg %p288
        $region66: #{tpu_custom_call.1} parent=31 // pred_check_branch
          %599 = sbr.rel (%p597) target = $region68
        $region67: #{tpu_custom_call.1} parent=31 // pred_region
          %p600 = scmp.lt.s32.totalorder %s35, 1
          %s601 = scalar_select %p600, %s35, 1
          %s602 = scalar_lea.vmem %s9, %s601
        $region68: #{tpu_custom_call.1} parent=31 // pred_fallthru
          _
        // Predicated region
        $region69: #{tpu_custom_call.1} parent=31 // pred_check
          %p603 = pneg %p314
        $region70: #{tpu_custom_call.1} parent=31 // pred_check_branch
          %605 = sbr.rel (%p603) target = $region72
        $region71: #{tpu_custom_call.1} parent=31 // pred_region
          %p606 = scmp.lt.s32.totalorder %s35, 1
          %s607 = scalar_select %p606, %s35, 1
          %s608 = scalar_lea.vmem %s10, %s607
        $region72: #{tpu_custom_call.1} parent=31 // pred_fallthru
          _
        // Predicated region
        $region73: #{tpu_custom_call.1} parent=31 // pred_check
          %p609 = pneg %p340
        $region74: #{tpu_custom_call.1} parent=31 // pred_check_branch
          %611 = sbr.rel (%p609) target = $region76
        $region75: #{tpu_custom_call.1} parent=31 // pred_region
          %p612 = scmp.lt.s32.totalorder %s35, 1
          %s613 = scalar_select %p612, %s35, 1
          %s614 = smul.addr %s613, 4
          %s615 = smul.addr %s614, 4
          %s616 = scalar_lea.vmem %s11, %s615
        $region76: #{tpu_custom_call.1} parent=31 // pred_fallthru
          _
        // Predicated region
        $region77: #{tpu_custom_call.1} parent=31 // pred_check
          %p617 = pneg %p366
        $region78: #{tpu_custom_call.1} parent=31 // pred_check_branch
          %619 = sbr.rel (%p617) target = $region80
        $region79: #{tpu_custom_call.1} parent=31 // pred_region
          %p620 = scmp.lt.s32.totalorder %s35, 1
          %s621 = scalar_select %p620, %s35, 1
          %s622 = scalar_lea.vmem %s12, %s621
        $region80: #{tpu_custom_call.1} parent=31 // pred_fallthru
          _
        // Predicated region
        $region81: #{tpu_custom_call.1} parent=31 // pred_check
          %p623 = pneg %p392
        $region82: #{tpu_custom_call.1} parent=31 // pred_check_branch
          %625 = sbr.rel (%p623) target = $region84
        $region83: #{tpu_custom_call.1} parent=31 // pred_region
          %p626 = scmp.lt.s32.totalorder %s35, 1
          %s627 = scalar_select %p626, %s35, 1
          %s628 = smul.addr %s627, 16
          %s629 = smul.addr %s628, 4
          %s630 = scalar_lea.vmem %s13, %s629
        $region84: #{tpu_custom_call.1} parent=31 // pred_fallthru
          _
        // Predicated region
        $region85: #{tpu_custom_call.1} parent=31 // pred_check
          %p631 = pneg %p418
        $region86: #{tpu_custom_call.1} parent=31 // pred_check_branch
          %633 = sbr.rel (%p631) target = $region88
        $region87: #{tpu_custom_call.1} parent=31 // pred_region
          %p634 = scmp.lt.s32.totalorder %s35, 1
          %s635 = scalar_select %p634, %s35, 1
          %s636 = scalar_lea.vmem %s14, %s635
        $region88: #{tpu_custom_call.1} parent=31 // pred_fallthru
          _
      $region32: #{tpu_custom_call.1} parent=5 // pred_fallthru
        _
      %p637 = scmp.le.s32.totalorder 1, %s27
      %p638 = scmp.lt.s32.totalorder %s27, 5
      %p639 = pnand %p637, %p638
      %p640 = pneg %p639
      // Predicated region
      $region89: #{tpu_custom_call.1} parent=5 // pred_check
        _
      $region90: #{tpu_custom_call.1} parent=5 // pred_check_branch
        %642 = sbr.rel (%p639) target = $region92
      $region91: #{tpu_custom_call.1} parent=5 // pred_region
        %s643 = ssub.s32 %s27, 1
        %p644 = scmp.lt.s32.totalorder %s36, 1
        %s645 = scalar_select %p644, %s36, 1
        %s646 = smul.addr %s645, 8
        %s647 = scalar_lea.vmem %s0, %s646
        %p648 = pneg %p65
        %p649 = pneg %p62
        %p650 = pneg %p86
        %p651 = pneg %p83
        %p652 = scmp.lt.s32.totalorder %s36, 1
        %s653 = scalar_select %p652, %s36, 1
        %s654 = scalar_lea.vmem %s2, %s653
        %p655 = pneg %p112
        %p656 = pneg %p109
        %p657 = scmp.lt.s32.totalorder %s37, 1
        %s658 = scalar_select %p657, %s37, 1
        %s659 = scalar_lea.vmem %s3, %s658
        %p660 = pneg %p138
        %p661 = pneg %p135
        %p662 = scmp.lt.s32.totalorder %s37, 1
        %s663 = scalar_select %p662, %s37, 1
        %s664 = scalar_lea.vmem %s4, %s663
        %p665 = pneg %p164
        %p666 = pneg %p161
        %p667 = scmp.lt.s32.totalorder %s37, 1
        %s668 = scalar_select %p667, %s37, 1
        %s669 = smul.addr %s668, 4
        %s670 = smul.addr %s669, 4
        %s671 = scalar_lea.vmem %s5, %s670
        %p672 = pneg %p190
        %p673 = pneg %p187
        %p674 = scmp.lt.s32.totalorder %s37, 1
        %s675 = scalar_select %p674, %s37, 1
        %s676 = scalar_lea.vmem %s6, %s675
        %p677 = pneg %p216
        %p678 = pneg %p213
        %p679 = scmp.lt.s32.totalorder %s37, 1
        %s680 = scalar_select %p679, %s37, 1
        %s681 = smul.addr %s680, 4
        %s682 = smul.addr %s681, 4
        %s683 = scalar_lea.vmem %s7, %s682
        %p684 = pneg %p242
        %p685 = pneg %p239
        %p686 = scmp.lt.s32.totalorder %s37, 1
        %s687 = scalar_select %p686, %s37, 1
        %s688 = scalar_lea.vmem %s8, %s687
        %p689 = pneg %p268
        %p690 = pneg %p265
        %p691 = scmp.lt.s32.totalorder %s37, 1
        %s692 = scalar_select %p691, %s37, 1
        %s693 = scalar_lea.vmem %s9, %s692
        %p694 = pneg %p294
        %p695 = pneg %p291
        %p696 = scmp.lt.s32.totalorder %s37, 1
        %s697 = scalar_select %p696, %s37, 1
        %s698 = scalar_lea.vmem %s10, %s697
        %p699 = pneg %p320
        %p700 = pneg %p317
        %p701 = scmp.lt.s32.totalorder %s37, 1
        %s702 = scalar_select %p701, %s37, 1
        %s703 = smul.addr %s702, 4
        %s704 = smul.addr %s703, 4
        %s705 = scalar_lea.vmem %s11, %s704
        %p706 = pneg %p346
        %p707 = pneg %p343
        %p708 = scmp.lt.s32.totalorder %s37, 1
        %s709 = scalar_select %p708, %s37, 1
        %s710 = scalar_lea.vmem %s12, %s709
        %p711 = pneg %p372
        %p712 = pneg %p369
        %p713 = scmp.lt.s32.totalorder %s37, 1
        %s714 = scalar_select %p713, %s37, 1
        %s715 = smul.addr %s714, 16
        %s716 = smul.addr %s715, 4
        %s717 = scalar_lea.vmem %s13, %s716
        %p718 = pneg %p398
        %p719 = pneg %p395
        %p720 = scmp.lt.s32.totalorder %s37, 1
        %s721 = scalar_select %p720, %s37, 1
        %s722 = scalar_lea.vmem %s14, %s721
        %p723 = pneg %p424
        %p724 = pneg %p421
        %p725 = pneg %p445
        %p726 = pneg %p442
        %p727 = pneg %p466
        %p728 = pneg %p463
        %p729 = pneg %p487
        %p730 = pneg %p484
        %p731 = pneg %p513
        %p732 = pneg %p510
        %s733 = sand.u32 %s500, 1
        %s734 = scalar_lea.sflag [#allocation4], %s733
        %s735 = sand.u32 %s500, 1
        %s736 = scalar_lea.vmem [#allocation3], %s735
        %p737 = scmp.lt.s32.totalorder %s36, 1
        %s738 = scalar_select %p737, %s36, 1
        %s739 = smul.addr %s738, 8
        %s740 = scalar_lea.vmem %s0, %s739
        %p741 = scmp.lt.s32.totalorder %s36, 1
        %s742 = scalar_select %p741, %s36, 1
        %s743 = scalar_lea.vmem %s2, %s742
        %p744 = scmp.lt.s32.totalorder %s37, 1
        %s745 = scalar_select %p744, %s37, 1
        %s746 = scalar_lea.vmem %s3, %s745
        %p747 = scmp.lt.s32.totalorder %s37, 1
        %s748 = scalar_select %p747, %s37, 1
        %s749 = scalar_lea.vmem %s4, %s748
        %p750 = scmp.lt.s32.totalorder %s37, 1
        %s751 = scalar_select %p750, %s37, 1
        %s752 = smul.addr %s751, 4
        %s753 = smul.addr %s752, 4
        %s754 = scalar_lea.vmem %s5, %s753
        %p755 = scmp.lt.s32.totalorder %s37, 1
        %s756 = scalar_select %p755, %s37, 1
        %s757 = scalar_lea.vmem %s6, %s756
        %p758 = scmp.lt.s32.totalorder %s37, 1
        %s759 = scalar_select %p758, %s37, 1
        %s760 = smul.addr %s759, 4
        %s761 = smul.addr %s760, 4
        %s762 = scalar_lea.vmem %s7, %s761
        %p763 = scmp.lt.s32.totalorder %s37, 1
        %s764 = scalar_select %p763, %s37, 1
        %s765 = scalar_lea.vmem %s8, %s764
        %p766 = scmp.lt.s32.totalorder %s37, 1
        %s767 = scalar_select %p766, %s37, 1
        %s768 = scalar_lea.vmem %s9, %s767
        %p769 = scmp.lt.s32.totalorder %s37, 1
        %s770 = scalar_select %p769, %s37, 1
        %s771 = scalar_lea.vmem %s10, %s770
        %p772 = scmp.lt.s32.totalorder %s37, 1
        %s773 = scalar_select %p772, %s37, 1
        %s774 = smul.addr %s773, 4
        %s775 = smul.addr %s774, 4
        %s776 = scalar_lea.vmem %s11, %s775
        %p777 = scmp.lt.s32.totalorder %s37, 1
        %s778 = scalar_select %p777, %s37, 1
        %s779 = scalar_lea.vmem %s12, %s778
        %p780 = scmp.lt.s32.totalorder %s37, 1
        %s781 = scalar_select %p780, %s37, 1
        %s782 = smul.addr %s781, 16
        %s783 = smul.addr %s782, 4
        %s784 = scalar_lea.vmem %s13, %s783
        %p785 = scmp.lt.s32.totalorder %s37, 1
        %s786 = scalar_select %p785, %s37, 1
        %s787 = scalar_lea.vmem %s14, %s786
        %p789 = scmp.eq.s32.totalorder %s37, 0
        // Predicated region
        $region93: #{tpu_custom_call.1} parent=91 // pred_check
          %p790 = pneg %p789
        $region94: #{tpu_custom_call.1} parent=91 // pred_check_branch
          %792 = sbr.rel (%p790) target = $region96
        $region95: #{tpu_custom_call.1} parent=91 // pred_region
          %v793 = vld [vmem:[%s740] sm:$0xff]
          %v794 = vld [vmem:[%s1] sm:$0xff]
          %v795 = vadd.f32 %v793, %v794
          %vm796 = vcmask 261120
          %797 = vst.msk [vmem:[#allocation2] sm:$0xff] %vm796, %v795
        $region96: #{tpu_custom_call.1} parent=91 // pred_fallthru
          _
        %v798 = vld [vmem:[#allocation2] sm:$0xff]
        %v799 = vlaneseq
        %v800 = vshrl.u32 %v799, 7
        %v801 = vlaneseq
        %v802 = vand.u32 %v801, 127
        %vm803 = vcmp.le.s32.totalorder %v802, %v800
        %v804 = vld [vmem:[%s746] sm:$0x1]
        %v805 = vld [vmem:[%s749] sm:$0x1]
        %vm806 = vcmask 261120
        %v807 = vsel %vm806, %v798, 0.0
        %808 = vadd.xlane.f32.xlu0 %v807
        %v809 = vpop.xlane.xlu0 %808
        %v810 = vrcp.pop 32.0
        %v811 = vmul.f32 %v809, %v810
        %v812 = vsub.f32 %v798, %v811
        %v813 = vmul.f32 %v812, %v812
        %v814 = vsel %vm806, %v813, 0.0
        %815 = vadd.xlane.f32.xlu0 %v814
        %v816 = vpop.xlane.xlu0 %815
        %v817 = vmul.f32 %v816, %v810
        %v818 = vadd.f32 %v817, 1e-05
        %v819 = vrsqrt.pop %v818
        %v820 = vmul.f32 %v812, %v819
        %v822 = vlaneseq
        %v823 = vshrl.u32 %v822, 7
        %v824 = vsub.s32 0, %v823
        %v825 = vrot.slane %v804, %v824
        %v827 = vmul.f32 %v820, %v825
        %v829 = vlaneseq
        %v830 = vshrl.u32 %v829, 7
        %v831 = vsub.s32 0, %v830
        %v832 = vrot.slane %v805, %v831
        %v834 = vadd.f32 %v827, %v832
        %v835 = vpack.c.bf16 %v834, %v834
        %v836 = vld [vmem:[%s754] sm:$0xf]
        %v837 = vld [vmem:[%s754 + $0x4] sm:$0xf]
        %v838 = vld [vmem:[%s754 + $0x8] sm:$0xf]
        %v839 = vld [vmem:[%s754 + $0xc] sm:$0xf]
        %v840 = vld [vmem:[%s757] sm:$0x1]
        %v842 = vlaneseq
        %v843 = vshrl.u32 %v842, 7
        %v844 = vsub.s32 0, %v843
        %v845 = vrot.slane %v840, %v844
        %v851 = vunpack.c.l.b16 %v836
        %v852 = vunpack.c.l.b16 %v837
        %v853 = vunpack.c.l.b16 %v838
        %v854 = vunpack.c.l.b16 %v839
        %v855 = vpack.c.b16 %v852, %v851
        %v856 = vpack.c.b16 %v854, %v853
        %v860 = vsel %vm806, %v835, 0
        %862 = vmatprep.subr.bf16.mxu0 0
        %863 = vmatpush1.bf16.msra.mxu0 0
        %864 = vmatprep.subr.bf16.mxu0 0
        %865 = vmatpush1.bf16.msra.mxu0 0
        %866 = vmatprep.subr.bf16.mxu0 0
        %867 = vmatpush1.bf16.msra.mxu0 0
        %868 = vmatprep.subr.bf16.mxu0 0
        %869 = vmatpush1.bf16.msra.mxu0 0
        %870 = vmatprep.subr.bf16.mxu0 0
        %871 = vmatpush1.bf16.msra.mxu0 0
        %872 = vmatprep.subr.bf16.mxu0 0
        %873 = vmatpush1.bf16.msra.mxu0 0
        %874 = vmatprep.subr.bf16.mxu0 0
        %875 = vmatpush1.bf16.msra.mxu0 %v856
        %876 = vmatprep.subr.bf16.mxu0 0
        %877 = vmatpush1.bf16.msra.mxu0 %v855
        %878 = vmatprep.subr.bf16.mxu0 0
        %879 = vmatpush2.bf16.msra.mxu0 0
        %880 = vmatprep.subr.bf16.mxu0 0
        %881 = vmatpush2.bf16.msra.mxu0 0
        %882 = vmatprep.subr.bf16.mxu0 0
        %883 = vmatpush2.bf16.msra.mxu0 0
        %884 = vmatprep.subr.bf16.mxu0 0
        %885 = vmatpush2.bf16.msra.mxu0 0
        %886 = vmatprep.subr.bf16.mxu0 0
        %887 = vmatpush2.bf16.msra.mxu0 0
        %888 = vmatprep.subr.bf16.mxu0 0
        %889 = vmatpush2.bf16.msra.mxu0 0
        %890 = vmatprep.subr.bf16.mxu0 0
        %891 = vmatpush2.bf16.msra.mxu0 0
        %892 = vmatprep.subr.bf16.mxu0 0
        %893 = vmatpush2.bf16.msra.mxu0 0
        %894 = vmatprep.mubr.bf16.mxu0 0
        %895 = vmatmul.mubr.bf16.gmra.mxu0 %v860
        %v896 = vpop.f32.mrf.mxu0
        %v897 = vadd.f32 %v845, %v896
        %v898 = vpop.f32.mrf.mxu0
        %v899 = vpop.f32.mrf.mxu0
        %v900 = vpop.f32.mrf.mxu0
        %901 = vdwg.mxu0
        %v902 = vpack.c.bf16 %v897, %v897
        %904 = vrot.lane.b32.xlu0 %v902, 96
        %v905 = vpop.permute.xlu0 %904
        %vm906 = vcmask 64512
        %v908 = vsel %vm906, %v902, 0
        %v911 = vsel %vm906, %v905, 0
        %913 = vmatprep.subr.bf16.mxu0 0
        %914 = vmatpush1.bf16.xpose.msra.mxu0 0
        %915 = vmatprep.subr.bf16.mxu0 0
        %916 = vmatpush1.bf16.xpose.msra.mxu0 0
        %917 = vmatprep.subr.bf16.mxu0 0
        %918 = vmatpush1.bf16.xpose.msra.mxu0 0
        %919 = vmatprep.subr.bf16.mxu0 0
        %920 = vmatpush1.bf16.xpose.msra.mxu0 0
        %921 = vmatprep.subr.bf16.mxu0 0
        %922 = vmatpush1.bf16.xpose.msra.mxu0 0
        %923 = vmatprep.subr.bf16.mxu0 0
        %924 = vmatpush1.bf16.xpose.msra.mxu0 0
        %925 = vmatprep.subr.bf16.mxu0 0
        %926 = vmatpush1.bf16.xpose.msra.mxu0 0
        %927 = vmatprep.subr.bf16.mxu0 0
        %928 = vmatpush1.bf16.xpose.msra.mxu0 %v911
        %929 = vmatprep.subr.bf16.mxu0 0
        %930 = vmatpush2.bf16.xpose.msra.mxu0 0
        %931 = vmatprep.subr.bf16.mxu0 0
        %932 = vmatpush2.bf16.xpose.msra.mxu0 0
        %933 = vmatprep.subr.bf16.mxu0 0
        %934 = vmatpush2.bf16.xpose.msra.mxu0 0
        %935 = vmatprep.subr.bf16.mxu0 0
        %936 = vmatpush2.bf16.xpose.msra.mxu0 0
        %937 = vmatprep.subr.bf16.mxu0 0
        %938 = vmatpush2.bf16.xpose.msra.mxu0 0
        %939 = vmatprep.subr.bf16.mxu0 0
        %940 = vmatpush2.bf16.xpose.msra.mxu0 0
        %941 = vmatprep.subr.bf16.mxu0 0
        %942 = vmatpush2.bf16.xpose.msra.mxu0 0
        %943 = vmatprep.subr.bf16.mxu0 0
        %944 = vmatpush2.bf16.xpose.msra.mxu0 0
        %945 = vmatprep.mubr.bf16.mxu0 0
        %946 = vmatmul.mubr.bf16.gmra.mxu0 %v908
        %v947 = vpop.f32.mrf.mxu0
        %v948 = vadd.f32 0.0, %v947
        %v949 = vpop.f32.mrf.mxu0
        %v950 = vpop.f32.mrf.mxu0
        %v951 = vpop.f32.mrf.mxu0
        %952 = vdwg.mxu0
        %v953 = vsel %vm803, %v948, -1e+30
        %v954 = vsel %vm906, %v953, -inf
        %955 = vmax.xlane.f32.xlu0 %v954
        %v956 = vpop.xlane.xlu0 %955
        %v957 = vsub.f32 %v953, %v956
        %v958 = vmul.f32 %v957, 1.442695
        %v959 = vpow.pop %v958
        %v960 = vsel %vm906, %v959, 0.0
        %961 = vadd.xlane.f32.xlu0 %v960
        %v962 = vpop.xlane.xlu0 %961
        %v963 = vrcp.pop %v962
        %v964 = vmul.f32 %v959, %v963
        %v965 = vpack.c.bf16 %v964, %v964
        %966 = vrot.lane.b32.xlu0 %v902, 64
        %v967 = vpop.permute.xlu0 %966
        %v969 = vsel %vm906, %v965, 0
        %vm971 = vcmask 1043456
        %v973 = vsel %vm971, %v967, 0
        %975 = vmatprep.subr.bf16.mxu0 0
        %976 = vmatpush1.bf16.msra.mxu0 0
        %977 = vmatprep.subr.bf16.mxu0 0
        %978 = vmatpush1.bf16.msra.mxu0 0
        %979 = vmatprep.subr.bf16.mxu0 0
        %980 = vmatpush1.bf16.msra.mxu0 0
        %981 = vmatprep.subr.bf16.mxu0 0
        %982 = vmatpush1.bf16.msra.mxu0 0
        %983 = vmatprep.subr.bf16.mxu0 0
        %984 = vmatpush1.bf16.msra.mxu0 0
        %985 = vmatprep.subr.bf16.mxu0 0
        %986 = vmatpush1.bf16.msra.mxu0 0
        %987 = vmatprep.subr.bf16.mxu0 0
        %988 = vmatpush1.bf16.msra.mxu0 0
        %989 = vmatprep.subr.bf16.mxu0 0
        %990 = vmatpush1.bf16.msra.mxu0 %v973
        %991 = vmatprep.subr.bf16.mxu0 0
        %992 = vmatpush2.bf16.msra.mxu0 0
        %993 = vmatprep.subr.bf16.mxu0 0
        %994 = vmatpush2.bf16.msra.mxu0 0
        %995 = vmatprep.subr.bf16.mxu0 0
        %996 = vmatpush2.bf16.msra.mxu0 0
        %997 = vmatprep.subr.bf16.mxu0 0
        %998 = vmatpush2.bf16.msra.mxu0 0
        %999 = vmatprep.subr.bf16.mxu0 0
        %1000 = vmatpush2.bf16.msra.mxu0 0
        %1001 = vmatprep.subr.bf16.mxu0 0
        %1002 = vmatpush2.bf16.msra.mxu0 0
        %1003 = vmatprep.subr.bf16.mxu0 0
        %1004 = vmatpush2.bf16.msra.mxu0 0
        %1005 = vmatprep.subr.bf16.mxu0 0
        %1006 = vmatpush2.bf16.msra.mxu0 0
        %1007 = vmatprep.mubr.bf16.mxu0 0
        %1008 = vmatmul.mubr.bf16.gmra.mxu0 %v969
        %v1009 = vpop.f32.mrf.mxu0
        %v1010 = vadd.f32 0.0, %v1009
        %v1011 = vpop.f32.mrf.mxu0
        %v1012 = vpop.f32.mrf.mxu0
        %v1013 = vpop.f32.mrf.mxu0
        %1014 = vdwg.mxu0
        %1015 = vrot.lane.b32.xlu0 %v902, 120
        %v1016 = vpop.permute.xlu0 %1015
        %1017 = vrot.lane.b32.xlu0 %v902, 88
        %v1018 = vpop.permute.xlu0 %1017
        %v1020 = vsel %vm906, %v1016, 0
        %v1023 = vsel %vm906, %v1018, 0
        %1025 = vmatprep.subr.bf16.mxu0 0
        %1026 = vmatpush1.bf16.xpose.msra.mxu0 0
        %1027 = vmatprep.subr.bf16.mxu0 0
        %1028 = vmatpush1.bf16.xpose.msra.mxu0 0
        %1029 = vmatprep.subr.bf16.mxu0 0
        %1030 = vmatpush1.bf16.xpose.msra.mxu0 0
        %1031 = vmatprep.subr.bf16.mxu0 0
        %1032 = vmatpush1.bf16.xpose.msra.mxu0 0
        %1033 = vmatprep.subr.bf16.mxu0 0
        %1034 = vmatpush1.bf16.xpose.msra.mxu0 0
        %1035 = vmatprep.subr.bf16.mxu0 0
        %1036 = vmatpush1.bf16.xpose.msra.mxu0 0
        %1037 = vmatprep.subr.bf16.mxu0 0
        %1038 = vmatpush1.bf16.xpose.msra.mxu0 0
        %1039 = vmatprep.subr.bf16.mxu0 0
        %1040 = vmatpush1.bf16.xpose.msra.mxu0 %v1023
        %1041 = vmatprep.subr.bf16.mxu0 0
        %1042 = vmatpush2.bf16.xpose.msra.mxu0 0
        %1043 = vmatprep.subr.bf16.mxu0 0
        %1044 = vmatpush2.bf16.xpose.msra.mxu0 0
        %1045 = vmatprep.subr.bf16.mxu0 0
        %1046 = vmatpush2.bf16.xpose.msra.mxu0 0
        %1047 = vmatprep.subr.bf16.mxu0 0
        %1048 = vmatpush2.bf16.xpose.msra.mxu0 0
        %1049 = vmatprep.subr.bf16.mxu0 0
        %1050 = vmatpush2.bf16.xpose.msra.mxu0 0
        %1051 = vmatprep.subr.bf16.mxu0 0
        %1052 = vmatpush2.bf16.xpose.msra.mxu0 0
        %1053 = vmatprep.subr.bf16.mxu0 0
        %1054 = vmatpush2.bf16.xpose.msra.mxu0 0
        %1055 = vmatprep.subr.bf16.mxu0 0
        %1056 = vmatpush2.bf16.xpose.msra.mxu0 0
        %1057 = vmatprep.mubr.bf16.mxu0 0
        %1058 = vmatmul.mubr.bf16.gmra.mxu0 %v1020
        %v1059 = vpop.f32.mrf.mxu0
        %v1060 = vadd.f32 0.0, %v1059
        %v1061 = vpop.f32.mrf.mxu0
        %v1062 = vpop.f32.mrf.mxu0
        %v1063 = vpop.f32.mrf.mxu0
        %1064 = vdwg.mxu0
        %v1065 = vsel %vm803, %v1060, -1e+30
        %v1066 = vsel %vm906, %v1065, -inf
        %1067 = vmax.xlane.f32.xlu0 %v1066
        %v1068 = vpop.xlane.xlu0 %1067
        %v1069 = vsub.f32 %v1065, %v1068
        %v1070 = vmul.f32 %v1069, 1.442695
        %v1071 = vpow.pop %v1070
        %v1072 = vsel %vm906, %v1071, 0.0
        %1073 = vadd.xlane.f32.xlu0 %v1072
        %v1074 = vpop.xlane.xlu0 %1073
        %v1075 = vrcp.pop %v1074
        %v1076 = vmul.f32 %v1071, %v1075
        %v1077 = vpack.c.bf16 %v1076, %v1076
        %1078 = vrot.lane.b32.xlu0 %v902, 56
        %v1079 = vpop.permute.xlu0 %1078
        %v1081 = vsel %vm906, %v1077, 0
        %v1084 = vsel %vm971, %v1079, 0
        %1086 = vmatprep.subr.bf16.mxu0 0
        %1087 = vmatpush1.bf16.msra.mxu0 0
        %1088 = vmatprep.subr.bf16.mxu0 0
        %1089 = vmatpush1.bf16.msra.mxu0 0
        %1090 = vmatprep.subr.bf16.mxu0 0
        %1091 = vmatpush1.bf16.msra.mxu0 0
        %1092 = vmatprep.subr.bf16.mxu0 0
        %1093 = vmatpush1.bf16.msra.mxu0 0
        %1094 = vmatprep.subr.bf16.mxu0 0
        %1095 = vmatpush1.bf16.msra.mxu0 0
        %1096 = vmatprep.subr.bf16.mxu0 0
        %1097 = vmatpush1.bf16.msra.mxu0 0
        %1098 = vmatprep.subr.bf16.mxu0 0
        %1099 = vmatpush1.bf16.msra.mxu0 0
        %1100 = vmatprep.subr.bf16.mxu0 0
        %1101 = vmatpush1.bf16.msra.mxu0 %v1084
        %1102 = vmatprep.subr.bf16.mxu0 0
        %1103 = vmatpush2.bf16.msra.mxu0 0
        %1104 = vmatprep.subr.bf16.mxu0 0
        %1105 = vmatpush2.bf16.msra.mxu0 0
        %1106 = vmatprep.subr.bf16.mxu0 0
        %1107 = vmatpush2.bf16.msra.mxu0 0
        %1108 = vmatprep.subr.bf16.mxu0 0
        %1109 = vmatpush2.bf16.msra.mxu0 0
        %1110 = vmatprep.subr.bf16.mxu0 0
        %1111 = vmatpush2.bf16.msra.mxu0 0
        %1112 = vmatprep.subr.bf16.mxu0 0
        %1113 = vmatpush2.bf16.msra.mxu0 0
        %1114 = vmatprep.subr.bf16.mxu0 0
        %1115 = vmatpush2.bf16.msra.mxu0 0
        %1116 = vmatprep.subr.bf16.mxu0 0
        %1117 = vmatpush2.bf16.msra.mxu0 0
        %1118 = vmatprep.mubr.bf16.mxu0 0
        %1119 = vmatmul.mubr.bf16.gmra.mxu0 %v1081
        %v1120 = vpop.f32.mrf.mxu0
        %v1121 = vadd.f32 0.0, %v1120
        %v1122 = vpop.f32.mrf.mxu0
        %v1123 = vpop.f32.mrf.mxu0
        %v1124 = vpop.f32.mrf.mxu0
        %1125 = vdwg.mxu0
        %1126 = vrot.lane.b32.xlu0 %v902, 112
        %v1127 = vpop.permute.xlu0 %1126
        %1128 = vrot.lane.b32.xlu0 %v902, 80
        %v1129 = vpop.permute.xlu0 %1128
        %v1131 = vsel %vm906, %v1127, 0
        %v1134 = vsel %vm906, %v1129, 0
        %1136 = vmatprep.subr.bf16.mxu0 0
        %1137 = vmatpush1.bf16.xpose.msra.mxu0 0
        %1138 = vmatprep.subr.bf16.mxu0 0
        %1139 = vmatpush1.bf16.xpose.msra.mxu0 0
        %1140 = vmatprep.subr.bf16.mxu0 0
        %1141 = vmatpush1.bf16.xpose.msra.mxu0 0
        %1142 = vmatprep.subr.bf16.mxu0 0
        %1143 = vmatpush1.bf16.xpose.msra.mxu0 0
        %1144 = vmatprep.subr.bf16.mxu0 0
        %1145 = vmatpush1.bf16.xpose.msra.mxu0 0
        %1146 = vmatprep.subr.bf16.mxu0 0
        %1147 = vmatpush1.bf16.xpose.msra.mxu0 0
        %1148 = vmatprep.subr.bf16.mxu0 0
        %1149 = vmatpush1.bf16.xpose.msra.mxu0 0
        %1150 = vmatprep.subr.bf16.mxu0 0
        %1151 = vmatpush1.bf16.xpose.msra.mxu0 %v1134
        %1152 = vmatprep.subr.bf16.mxu0 0
        %1153 = vmatpush2.bf16.xpose.msra.mxu0 0
        %1154 = vmatprep.subr.bf16.mxu0 0
        %1155 = vmatpush2.bf16.xpose.msra.mxu0 0
        %1156 = vmatprep.subr.bf16.mxu0 0
        %1157 = vmatpush2.bf16.xpose.msra.mxu0 0
        %1158 = vmatprep.subr.bf16.mxu0 0
        %1159 = vmatpush2.bf16.xpose.msra.mxu0 0
        %1160 = vmatprep.subr.bf16.mxu0 0
        %1161 = vmatpush2.bf16.xpose.msra.mxu0 0
        %1162 = vmatprep.subr.bf16.mxu0 0
        %1163 = vmatpush2.bf16.xpose.msra.mxu0 0
        %1164 = vmatprep.subr.bf16.mxu0 0
        %1165 = vmatpush2.bf16.xpose.msra.mxu0 0
        %1166 = vmatprep.subr.bf16.mxu0 0
        %1167 = vmatpush2.bf16.xpose.msra.mxu0 0
        %1168 = vmatprep.mubr.bf16.mxu0 0
        %1169 = vmatmul.mubr.bf16.gmra.mxu0 %v1131
        %v1170 = vpop.f32.mrf.mxu0
        %v1171 = vadd.f32 0.0, %v1170
        %v1172 = vpop.f32.mrf.mxu0
        %v1173 = vpop.f32.mrf.mxu0
        %v1174 = vpop.f32.mrf.mxu0
        %1175 = vdwg.mxu0
        %v1176 = vsel %vm803, %v1171, -1e+30
        %v1177 = vsel %vm906, %v1176, -inf
        %1178 = vmax.xlane.f32.xlu0 %v1177
        %v1179 = vpop.xlane.xlu0 %1178
        %v1180 = vsub.f32 %v1176, %v1179
        %v1181 = vmul.f32 %v1180, 1.442695
        %v1182 = vpow.pop %v1181
        %v1183 = vsel %vm906, %v1182, 0.0
        %1184 = vadd.xlane.f32.xlu0 %v1183
        %v1185 = vpop.xlane.xlu0 %1184
        %v1186 = vrcp.pop %v1185
        %v1187 = vmul.f32 %v1182, %v1186
        %v1188 = vpack.c.bf16 %v1187, %v1187
        %1189 = vrot.lane.b32.xlu0 %v902, 48
        %v1190 = vpop.permute.xlu0 %1189
        %v1192 = vsel %vm906, %v1188, 0
        %v1195 = vsel %vm971, %v1190, 0
        %1197 = vmatprep.subr.bf16.mxu0 0
        %1198 = vmatpush1.bf16.msra.mxu0 0
        %1199 = vmatprep.subr.bf16.mxu0 0
        %1200 = vmatpush1.bf16.msra.mxu0 0
        %1201 = vmatprep.subr.bf16.mxu0 0
        %1202 = vmatpush1.bf16.msra.mxu0 0
        %1203 = vmatprep.subr.bf16.mxu0 0
        %1204 = vmatpush1.bf16.msra.mxu0 0
        %1205 = vmatprep.subr.bf16.mxu0 0
        %1206 = vmatpush1.bf16.msra.mxu0 0
        %1207 = vmatprep.subr.bf16.mxu0 0
        %1208 = vmatpush1.bf16.msra.mxu0 0
        %1209 = vmatprep.subr.bf16.mxu0 0
        %1210 = vmatpush1.bf16.msra.mxu0 0
        %1211 = vmatprep.subr.bf16.mxu0 0
        %1212 = vmatpush1.bf16.msra.mxu0 %v1195
        %1213 = vmatprep.subr.bf16.mxu0 0
        %1214 = vmatpush2.bf16.msra.mxu0 0
        %1215 = vmatprep.subr.bf16.mxu0 0
        %1216 = vmatpush2.bf16.msra.mxu0 0
        %1217 = vmatprep.subr.bf16.mxu0 0
        %1218 = vmatpush2.bf16.msra.mxu0 0
        %1219 = vmatprep.subr.bf16.mxu0 0
        %1220 = vmatpush2.bf16.msra.mxu0 0
        %1221 = vmatprep.subr.bf16.mxu0 0
        %1222 = vmatpush2.bf16.msra.mxu0 0
        %1223 = vmatprep.subr.bf16.mxu0 0
        %1224 = vmatpush2.bf16.msra.mxu0 0
        %1225 = vmatprep.subr.bf16.mxu0 0
        %1226 = vmatpush2.bf16.msra.mxu0 0
        %1227 = vmatprep.subr.bf16.mxu0 0
        %1228 = vmatpush2.bf16.msra.mxu0 0
        %1229 = vmatprep.mubr.bf16.mxu0 0
        %1230 = vmatmul.mubr.bf16.gmra.mxu0 %v1192
        %v1231 = vpop.f32.mrf.mxu0
        %v1232 = vadd.f32 0.0, %v1231
        %v1233 = vpop.f32.mrf.mxu0
        %v1234 = vpop.f32.mrf.mxu0
        %v1235 = vpop.f32.mrf.mxu0
        %1236 = vdwg.mxu0
        %1237 = vrot.lane.b32.xlu0 %v902, 104
        %v1238 = vpop.permute.xlu0 %1237
        %1239 = vrot.lane.b32.xlu0 %v902, 72
        %v1240 = vpop.permute.xlu0 %1239
        %v1242 = vsel %vm906, %v1238, 0
        %v1245 = vsel %vm906, %v1240, 0
        %1247 = vmatprep.subr.bf16.mxu0 0
        %1248 = vmatpush1.bf16.xpose.msra.mxu0 0
        %1249 = vmatprep.subr.bf16.mxu0 0
        %1250 = vmatpush1.bf16.xpose.msra.mxu0 0
        %1251 = vmatprep.subr.bf16.mxu0 0
        %1252 = vmatpush1.bf16.xpose.msra.mxu0 0
        %1253 = vmatprep.subr.bf16.mxu0 0
        %1254 = vmatpush1.bf16.xpose.msra.mxu0 0
        %1255 = vmatprep.subr.bf16.mxu0 0
        %1256 = vmatpush1.bf16.xpose.msra.mxu0 0
        %1257 = vmatprep.subr.bf16.mxu0 0
        %1258 = vmatpush1.bf16.xpose.msra.mxu0 0
        %1259 = vmatprep.subr.bf16.mxu0 0
        %1260 = vmatpush1.bf16.xpose.msra.mxu0 0
        %1261 = vmatprep.subr.bf16.mxu0 0
        %1262 = vmatpush1.bf16.xpose.msra.mxu0 %v1245
        %1263 = vmatprep.subr.bf16.mxu0 0
        %1264 = vmatpush2.bf16.xpose.msra.mxu0 0
        %1265 = vmatprep.subr.bf16.mxu0 0
        %1266 = vmatpush2.bf16.xpose.msra.mxu0 0
        %1267 = vmatprep.subr.bf16.mxu0 0
        %1268 = vmatpush2.bf16.xpose.msra.mxu0 0
        %1269 = vmatprep.subr.bf16.mxu0 0
        %1270 = vmatpush2.bf16.xpose.msra.mxu0 0
        %1271 = vmatprep.subr.bf16.mxu0 0
        %1272 = vmatpush2.bf16.xpose.msra.mxu0 0
        %1273 = vmatprep.subr.bf16.mxu0 0
        %1274 = vmatpush2.bf16.xpose.msra.mxu0 0
        %1275 = vmatprep.subr.bf16.mxu0 0
        %1276 = vmatpush2.bf16.xpose.msra.mxu0 0
        %1277 = vmatprep.subr.bf16.mxu0 0
        %1278 = vmatpush2.bf16.xpose.msra.mxu0 0
        %1279 = vmatprep.mubr.bf16.mxu0 0
        %1280 = vmatmul.mubr.bf16.gmra.mxu0 %v1242
        %v1281 = vpop.f32.mrf.mxu0
        %v1282 = vadd.f32 0.0, %v1281
        %v1283 = vpop.f32.mrf.mxu0
        %v1284 = vpop.f32.mrf.mxu0
        %v1285 = vpop.f32.mrf.mxu0
        %1286 = vdwg.mxu0
        %v1287 = vsel %vm803, %v1282, -1e+30
        %v1288 = vsel %vm906, %v1287, -inf
        %1289 = vmax.xlane.f32.xlu0 %v1288
        %v1290 = vpop.xlane.xlu0 %1289
        %v1291 = vsub.f32 %v1287, %v1290
        %v1292 = vmul.f32 %v1291, 1.442695
        %v1293 = vpow.pop %v1292
        %v1294 = vsel %vm906, %v1293, 0.0
        %1295 = vadd.xlane.f32.xlu0 %v1294
        %v1296 = vpop.xlane.xlu0 %1295
        %v1297 = vrcp.pop %v1296
        %v1298 = vmul.f32 %v1293, %v1297
        %v1299 = vpack.c.bf16 %v1298, %v1298
        %1300 = vrot.lane.b32.xlu0 %v902, 40
        %v1301 = vpop.permute.xlu0 %1300
        %v1303 = vsel %vm906, %v1299, 0
        %v1306 = vsel %vm971, %v1301, 0
        %1308 = vmatprep.subr.bf16.mxu0 0
        %1309 = vmatpush1.bf16.msra.mxu0 0
        %1310 = vmatprep.subr.bf16.mxu0 0
        %1311 = vmatpush1.bf16.msra.mxu0 0
        %1312 = vmatprep.subr.bf16.mxu0 0
        %1313 = vmatpush1.bf16.msra.mxu0 0
        %1314 = vmatprep.subr.bf16.mxu0 0
        %1315 = vmatpush1.bf16.msra.mxu0 0
        %1316 = vmatprep.subr.bf16.mxu0 0
        %1317 = vmatpush1.bf16.msra.mxu0 0
        %1318 = vmatprep.subr.bf16.mxu0 0
        %1319 = vmatpush1.bf16.msra.mxu0 0
        %1320 = vmatprep.subr.bf16.mxu0 0
        %1321 = vmatpush1.bf16.msra.mxu0 0
        %1322 = vmatprep.subr.bf16.mxu0 0
        %1323 = vmatpush1.bf16.msra.mxu0 %v1306
        %1324 = vmatprep.subr.bf16.mxu0 0
        %1325 = vmatpush2.bf16.msra.mxu0 0
        %1326 = vmatprep.subr.bf16.mxu0 0
        %1327 = vmatpush2.bf16.msra.mxu0 0
        %1328 = vmatprep.subr.bf16.mxu0 0
        %1329 = vmatpush2.bf16.msra.mxu0 0
        %1330 = vmatprep.subr.bf16.mxu0 0
        %1331 = vmatpush2.bf16.msra.mxu0 0
        %1332 = vmatprep.subr.bf16.mxu0 0
        %1333 = vmatpush2.bf16.msra.mxu0 0
        %1334 = vmatprep.subr.bf16.mxu0 0
        %1335 = vmatpush2.bf16.msra.mxu0 0
        %1336 = vmatprep.subr.bf16.mxu0 0
        %1337 = vmatpush2.bf16.msra.mxu0 0
        %1338 = vmatprep.subr.bf16.mxu0 0
        %1339 = vmatpush2.bf16.msra.mxu0 0
        %1340 = vmatprep.mubr.bf16.mxu0 0
        %1341 = vmatmul.mubr.bf16.gmra.mxu0 %v1303
        %v1342 = vpop.f32.mrf.mxu0
        %v1343 = vadd.f32 0.0, %v1342
        %v1344 = vpop.f32.mrf.mxu0
        %v1345 = vpop.f32.mrf.mxu0
        %v1346 = vpop.f32.mrf.mxu0
        %1347 = vdwg.mxu0
        %1349 = vrot.lane.b32.xlu0 %v1121, 8
        %v1350 = vpop.permute.xlu0 %1349
        %1353 = vrot.lane.b32.xlu0 %v1232, 16
        %v1354 = vpop.permute.xlu0 %1353
        %1357 = vrot.lane.b32.xlu0 %v1343, 24
        %v1358 = vpop.permute.xlu0 %1357
        %v1360 = vsel %vm906, %v1010, %v1350
        %vm1361 = vcmask 130048
        %v1362 = vsel %vm1361, %v1360, %v1354
        %vm1363 = vcmask 195584
        %v1364 = vsel %vm1363, %v1362, %v1358
        %v1365 = vpack.c.bf16 %v1364, %v1364
        %v1366 = vld [vmem:[%s762] sm:$0xf]
        %v1367 = vld [vmem:[%s762 + $0x4] sm:$0xf]
        %v1368 = vld [vmem:[%s762 + $0x8] sm:$0xf]
        %v1369 = vld [vmem:[%s762 + $0xc] sm:$0xf]
        %v1370 = vld [vmem:[%s765] sm:$0x1]
        %v1372 = vlaneseq
        %v1373 = vshrl.u32 %v1372, 7
        %v1374 = vsub.s32 0, %v1373
        %v1375 = vrot.slane %v1370, %v1374
        %v1381 = vunpack.c.l.b16 %v1366
        %v1382 = vunpack.c.l.b16 %v1367
        %v1383 = vunpack.c.l.b16 %v1368
        %v1384 = vunpack.c.l.b16 %v1369
        %v1385 = vpack.c.b16 %v1382, %v1381
        %v1386 = vpack.c.b16 %v1384, %v1383
        %v1390 = vsel %vm806, %v1365, 0
        %1392 = vmatprep.subr.bf16.mxu0 0
        %1393 = vmatpush1.bf16.msra.mxu0 0
        %1394 = vmatprep.subr.bf16.mxu0 0
        %1395 = vmatpush1.bf16.msra.mxu0 0
        %1396 = vmatprep.subr.bf16.mxu0 0
        %1397 = vmatpush1.bf16.msra.mxu0 0
        %1398 = vmatprep.subr.bf16.mxu0 0
        %1399 = vmatpush1.bf16.msra.mxu0 0
        %1400 = vmatprep.subr.bf16.mxu0 0
        %1401 = vmatpush1.bf16.msra.mxu0 0
        %1402 = vmatprep.subr.bf16.mxu0 0
        %1403 = vmatpush1.bf16.msra.mxu0 0
        %1404 = vmatprep.subr.bf16.mxu0 0
        %1405 = vmatpush1.bf16.msra.mxu0 %v1386
        %1406 = vmatprep.subr.bf16.mxu0 0
        %1407 = vmatpush1.bf16.msra.mxu0 %v1385
        %1408 = vmatprep.subr.bf16.mxu0 0
        %1409 = vmatpush2.bf16.msra.mxu0 0
        %1410 = vmatprep.subr.bf16.mxu0 0
        %1411 = vmatpush2.bf16.msra.mxu0 0
        %1412 = vmatprep.subr.bf16.mxu0 0
        %1413 = vmatpush2.bf16.msra.mxu0 0
        %1414 = vmatprep.subr.bf16.mxu0 0
        %1415 = vmatpush2.bf16.msra.mxu0 0
        %1416 = vmatprep.subr.bf16.mxu0 0
        %1417 = vmatpush2.bf16.msra.mxu0 0
        %1418 = vmatprep.subr.bf16.mxu0 0
        %1419 = vmatpush2.bf16.msra.mxu0 0
        %1420 = vmatprep.subr.bf16.mxu0 0
        %1421 = vmatpush2.bf16.msra.mxu0 0
        %1422 = vmatprep.subr.bf16.mxu0 0
        %1423 = vmatpush2.bf16.msra.mxu0 0
        %1424 = vmatprep.mubr.bf16.mxu0 0
        %1425 = vmatmul.mubr.bf16.gmra.mxu0 %v1390
        %v1426 = vpop.f32.mrf.mxu0
        %v1427 = vadd.f32 %v1375, %v1426
        %v1428 = vpop.f32.mrf.mxu0
        %v1429 = vpop.f32.mrf.mxu0
        %v1430 = vpop.f32.mrf.mxu0
        %1431 = vdwg.mxu0
        %v1432 = vadd.f32 %v798, %v1427
        %v1433 = vld [vmem:[%s768] sm:$0x1]
        %v1434 = vld [vmem:[%s771] sm:$0x1]
        %v1435 = vsel %vm806, %v1432, 0.0
        %1436 = vadd.xlane.f32.xlu0 %v1435
        %v1437 = vpop.xlane.xlu0 %1436
        %v1438 = vmul.f32 %v1437, %v810
        %v1439 = vsub.f32 %v1432, %v1438
        %v1440 = vmul.f32 %v1439, %v1439
        %v1441 = vsel %vm806, %v1440, 0.0
        %1442 = vadd.xlane.f32.xlu0 %v1441
        %v1443 = vpop.xlane.xlu0 %1442
        %v1444 = vmul.f32 %v1443, %v810
        %v1445 = vadd.f32 %v1444, 1e-05
        %v1446 = vrsqrt.pop %v1445
        %v1447 = vmul.f32 %v1439, %v1446
        %v1449 = vlaneseq
        %v1450 = vshrl.u32 %v1449, 7
        %v1451 = vsub.s32 0, %v1450
        %v1452 = vrot.slane %v1433, %v1451
        %v1454 = vmul.f32 %v1447, %v1452
        %v1456 = vlaneseq
        %v1457 = vshrl.u32 %v1456, 7
        %v1458 = vsub.s32 0, %v1457
        %v1459 = vrot.slane %v1434, %v1458
        %v1461 = vadd.f32 %v1454, %v1459
        %v1462 = vpack.c.bf16 %v1461, %v1461
        %v1463 = vld [vmem:[%s787] sm:$0x1]
        %v1465 = vlaneseq
        %v1466 = vshrl.u32 %v1465, 7
        %v1467 = vsub.s32 0, %v1466
        %v1468 = vrot.slane %v1463, %v1467
        %v1470 = vadd.f32 %v1468, 0.0
        %v1471 = vld [vmem:[%s776] sm:$0xf]
        %v1472 = vld [vmem:[%s776 + $0x4] sm:$0xf]
        %v1473 = vld [vmem:[%s776 + $0x8] sm:$0xf]
        %v1474 = vld [vmem:[%s776 + $0xc] sm:$0xf]
        %v1475 = vld [vmem:[%s779] sm:$0x1]
        %v1477 = vlaneseq
        %v1478 = vshrl.u32 %v1477, 7
        %v1479 = vsub.s32 0, %v1478
        %v1480 = vrot.slane %v1475, %v1479
        %v1486 = vunpack.c.l.b16 %v1471
        %v1487 = vunpack.c.l.b16 %v1472
        %v1488 = vunpack.c.l.b16 %v1473
        %v1489 = vunpack.c.l.b16 %v1474
        %v1490 = vpack.c.b16 %v1487, %v1486
        %v1491 = vpack.c.b16 %v1489, %v1488
        %v1495 = vsel %vm806, %v1462, 0
        %1497 = vmatprep.subr.bf16.mxu0 0
        %1498 = vmatpush1.bf16.msra.mxu0 0
        %1499 = vmatprep.subr.bf16.mxu0 0
        %1500 = vmatpush1.bf16.msra.mxu0 0
        %1501 = vmatprep.subr.bf16.mxu0 0
        %1502 = vmatpush1.bf16.msra.mxu0 0
        %1503 = vmatprep.subr.bf16.mxu0 0
        %1504 = vmatpush1.bf16.msra.mxu0 0
        %1505 = vmatprep.subr.bf16.mxu0 0
        %1506 = vmatpush1.bf16.msra.mxu0 0
        %1507 = vmatprep.subr.bf16.mxu0 0
        %1508 = vmatpush1.bf16.msra.mxu0 0
        %1509 = vmatprep.subr.bf16.mxu0 0
        %1510 = vmatpush1.bf16.msra.mxu0 %v1491
        %1511 = vmatprep.subr.bf16.mxu0 0
        %1512 = vmatpush1.bf16.msra.mxu0 %v1490
        %1513 = vmatprep.subr.bf16.mxu0 0
        %1514 = vmatpush2.bf16.msra.mxu0 0
        %1515 = vmatprep.subr.bf16.mxu0 0
        %1516 = vmatpush2.bf16.msra.mxu0 0
        %1517 = vmatprep.subr.bf16.mxu0 0
        %1518 = vmatpush2.bf16.msra.mxu0 0
        %1519 = vmatprep.subr.bf16.mxu0 0
        %1520 = vmatpush2.bf16.msra.mxu0 0
        %1521 = vmatprep.subr.bf16.mxu0 0
        %1522 = vmatpush2.bf16.msra.mxu0 0
        %1523 = vmatprep.subr.bf16.mxu0 0
        %1524 = vmatpush2.bf16.msra.mxu0 0
        %1525 = vmatprep.subr.bf16.mxu0 0
        %1526 = vmatpush2.bf16.msra.mxu0 0
        %1527 = vmatprep.subr.bf16.mxu0 0
        %1528 = vmatpush2.bf16.msra.mxu0 0
        %1529 = vmatprep.mubr.bf16.mxu0 0
        %1530 = vmatmul.mubr.bf16.gmra.mxu0 %v1495
        %v1531 = vpop.f32.mrf.mxu0
        %v1532 = vadd.f32 %v1480, %v1531
        %v1533 = vpop.f32.mrf.mxu0
        %v1534 = vpop.f32.mrf.mxu0
        %v1535 = vpop.f32.mrf.mxu0
        %1536 = vdwg.mxu0
        %v1537 = vmul.f32 %v1532, 1.702
        %v1538 = vxor.u32 %v1537, 2147483648
        %v1539 = vmul.f32 %v1538, 1.442695
        %v1540 = vpow.pop %v1539
        %v1541 = vadd.f32 %v1540, 1.0
        %v1542 = vrcp.pop %v1541
        %v1543 = vmul.f32 1.0, %v1542
        %v1544 = vmul.f32 %v1532, %v1543
        %v1545 = vpack.c.bf16 %v1544, %v1544
        %v1546 = vld [vmem:[%s784] sm:$0xf]
        %v1547 = vld [vmem:[%s784 + $0x4] sm:$0xf]
        %v1548 = vld [vmem:[%s784 + $0x8] sm:$0xf]
        %v1549 = vld [vmem:[%s784 + $0xc] sm:$0xf]
        %v1550 = vld [vmem:[%s784 + $0x10] sm:$0xf]
        %v1551 = vld [vmem:[%s784 + $0x14] sm:$0xf]
        %v1552 = vld [vmem:[%s784 + $0x18] sm:$0xf]
        %v1553 = vld [vmem:[%s784 + $0x1c] sm:$0xf]
        %v1554 = vld [vmem:[%s784 + $0x20] sm:$0xf]
        %v1555 = vld [vmem:[%s784 + $0x24] sm:$0xf]
        %v1556 = vld [vmem:[%s784 + $0x28] sm:$0xf]
        %v1557 = vld [vmem:[%s784 + $0x2c] sm:$0xf]
        %v1558 = vld [vmem:[%s784 + $0x30] sm:$0xf]
        %v1559 = vld [vmem:[%s784 + $0x34] sm:$0xf]
        %v1560 = vld [vmem:[%s784 + $0x38] sm:$0xf]
        %v1561 = vld [vmem:[%s784 + $0x3c] sm:$0xf]
        %v1578 = vunpack.c.l.b16 %v1546
        %v1579 = vunpack.c.l.b16 %v1547
        %v1580 = vunpack.c.l.b16 %v1548
        %v1581 = vunpack.c.l.b16 %v1549
        %v1582 = vunpack.c.l.b16 %v1550
        %v1583 = vunpack.c.l.b16 %v1551
        %v1584 = vunpack.c.l.b16 %v1552
        %v1585 = vunpack.c.l.b16 %v1553
        %v1586 = vunpack.c.l.b16 %v1554
        %v1587 = vunpack.c.l.b16 %v1555
        %v1588 = vunpack.c.l.b16 %v1556
        %v1589 = vunpack.c.l.b16 %v1557
        %v1590 = vunpack.c.l.b16 %v1558
        %v1591 = vunpack.c.l.b16 %v1559
        %v1592 = vunpack.c.l.b16 %v1560
        %v1593 = vunpack.c.l.b16 %v1561
        %v1594 = vpack.c.b16 %v1579, %v1578
        %v1595 = vpack.c.b16 %v1581, %v1580
        %v1596 = vpack.c.b16 %v1583, %v1582
        %v1597 = vpack.c.b16 %v1585, %v1584
        %v1598 = vpack.c.b16 %v1587, %v1586
        %v1599 = vpack.c.b16 %v1589, %v1588
        %v1600 = vpack.c.b16 %v1591, %v1590
        %v1601 = vpack.c.b16 %v1593, %v1592
        %1610 = vmatprep.subr.bf16.mxu0 0
        %1611 = vmatpush1.bf16.msra.mxu0 %v1601
        %1612 = vmatprep.subr.bf16.mxu0 0
        %1613 = vmatpush1.bf16.msra.mxu0 %v1600
        %1614 = vmatprep.subr.bf16.mxu0 0
        %1615 = vmatpush1.bf16.msra.mxu0 %v1599
        %1616 = vmatprep.subr.bf16.mxu0 0
        %1617 = vmatpush1.bf16.msra.mxu0 %v1598
        %1618 = vmatprep.subr.bf16.mxu0 0
        %1619 = vmatpush1.bf16.msra.mxu0 %v1597
        %1620 = vmatprep.subr.bf16.mxu0 0
        %1621 = vmatpush1.bf16.msra.mxu0 %v1596
        %1622 = vmatprep.subr.bf16.mxu0 0
        %1623 = vmatpush1.bf16.msra.mxu0 %v1595
        %1624 = vmatprep.subr.bf16.mxu0 0
        %1625 = vmatpush1.bf16.msra.mxu0 %v1594
        %1626 = vmatprep.subr.bf16.mxu0 0
        %1627 = vmatpush2.bf16.msra.mxu0 0
        %1628 = vmatprep.subr.bf16.mxu0 0
        %1629 = vmatpush2.bf16.msra.mxu0 0
        %1630 = vmatprep.subr.bf16.mxu0 0
        %1631 = vmatpush2.bf16.msra.mxu0 0
        %1632 = vmatprep.subr.bf16.mxu0 0
        %1633 = vmatpush2.bf16.msra.mxu0 0
        %1634 = vmatprep.subr.bf16.mxu0 0
        %1635 = vmatpush2.bf16.msra.mxu0 0
        %1636 = vmatprep.subr.bf16.mxu0 0
        %1637 = vmatpush2.bf16.msra.mxu0 0
        %1638 = vmatprep.subr.bf16.mxu0 0
        %1639 = vmatpush2.bf16.msra.mxu0 0
        %1640 = vmatprep.subr.bf16.mxu0 0
        %1641 = vmatpush2.bf16.msra.mxu0 0
        %1642 = vmatprep.mubr.bf16.mxu0 0
        %1643 = vmatmul.mubr.bf16.gmra.mxu0 %v1545
        %v1644 = vpop.f32.mrf.mxu0
        %v1645 = vadd.f32 0.0, %v1644
        %v1646 = vpop.f32.mrf.mxu0
        %v1647 = vpop.f32.mrf.mxu0
        %v1648 = vpop.f32.mrf.mxu0
        %1649 = vdwg.mxu0
        %v1650 = vadd.f32 %v1470, %v1645
        %v1651 = vadd.f32 %v1432, %v1650
        %1652 = vst.msk [vmem:[#allocation2] sm:$0xff] %vm806, %v1651
        %p1653 = scmp.eq.s32.totalorder %s37, 1
        // Predicated region
        $region97: #{tpu_custom_call.1} parent=91 // pred_check
          %p1654 = pneg %p1653
        $region98: #{tpu_custom_call.1} parent=91 // pred_check_branch
          %1656 = sbr.rel (%p1654) target = $region100
        $region99: #{tpu_custom_call.1} parent=91 // pred_region
          %v1657 = vld [vmem:[%s15] sm:$0x1]
          %v1658 = vld [vmem:[%s16] sm:$0x1]
          %v1659 = vsel %vm806, %v1651, 0.0
          %1660 = vadd.xlane.f32.xlu0 %v1659
          %v1661 = vpop.xlane.xlu0 %1660
          %v1662 = vmul.f32 %v1661, %v810
          %v1663 = vsub.f32 %v1651, %v1662
          %v1664 = vmul.f32 %v1663, %v1663
          %v1665 = vsel %vm806, %v1664, 0.0
          %1666 = vadd.xlane.f32.xlu0 %v1665
          %v1667 = vpop.xlane.xlu0 %1666
          %v1668 = vmul.f32 %v1667, %v810
          %v1669 = vadd.f32 %v1668, 1e-05
          %v1670 = vrsqrt.pop %v1669
          %v1671 = vmul.f32 %v1663, %v1670
          %v1673 = vlaneseq
          %v1674 = vshrl.u32 %v1673, 7
          %v1675 = vsub.s32 0, %v1674
          %v1676 = vrot.slane %v1657, %v1675
          %v1678 = vmul.f32 %v1671, %v1676
          %v1680 = vlaneseq
          %v1681 = vshrl.u32 %v1680, 7
          %v1682 = vsub.s32 0, %v1681
          %v1683 = vrot.slane %v1658, %v1682
          %v1685 = vadd.f32 %v1678, %v1683
          %v1686 = vld [vmem:[%s743] sm:$0x1]
          %v1688 = vsel %vm906, %v1686, 0
          %1690 = vmatprep.subr.mxu0 0.0
          %1691 = vmatpush1.msra.mxu0 0.0
          %1692 = vmatprep.subr.mxu0 0.0
          %1693 = vmatpush1.msra.mxu0 0.0
          %1694 = vmatprep.subr.mxu0 0.0
          %1695 = vmatpush1.msra.mxu0 0.0
          %1696 = vmatprep.subr.mxu0 0.0
          %1697 = vmatpush1.msra.mxu0 0.0
          %1698 = vmatprep.subr.mxu0 0.0
          %1699 = vmatpush1.msra.mxu0 0.0
          %1700 = vmatprep.subr.mxu0 0.0
          %1701 = vmatpush1.msra.mxu0 0.0
          %1702 = vmatprep.subr.mxu0 0.0
          %1703 = vmatpush1.msra.mxu0 0.0
          %1704 = vmatprep.subr.mxu0 0.0
          %1705 = vmatpush1.msra.mxu0 0.0
          %1706 = vmatprep.subr.mxu0 0.0
          %1707 = vmatpush1.msra.mxu0 0.0
          %1708 = vmatprep.subr.mxu0 0.0
          %1709 = vmatpush1.msra.mxu0 0.0
          %1710 = vmatprep.subr.mxu0 0.0
          %1711 = vmatpush1.msra.mxu0 0.0
          %1712 = vmatprep.subr.mxu0 0.0
          %1713 = vmatpush1.msra.mxu0 0.0
          %1714 = vmatprep.subr.mxu0 0.0
          %1715 = vmatpush1.msra.mxu0 0.0
          %1716 = vmatprep.subr.mxu0 0.0
          %1717 = vmatpush1.msra.mxu0 0.0
          %1718 = vmatprep.subr.mxu0 0.0
          %1719 = vmatpush1.msra.mxu0 0.0
          %1720 = vmatprep.subr.mxu0 0.0
          %1721 = vmatpush1.msra.mxu0 %v1685
          %1722 = vmatprep.subr.mxu0 0.0
          %1723 = vmatpush2.msra.mxu0 0.0
          %1724 = vmatprep.subr.mxu0 0.0
          %1725 = vmatpush2.msra.mxu0 0.0
          %1726 = vmatprep.subr.mxu0 0.0
          %1727 = vmatpush2.msra.mxu0 0.0
          %1728 = vmatprep.subr.mxu0 0.0
          %1729 = vmatpush2.msra.mxu0 0.0
          %1730 = vmatprep.subr.mxu0 0.0
          %1731 = vmatpush2.msra.mxu0 0.0
          %1732 = vmatprep.subr.mxu0 0.0
          %1733 = vmatpush2.msra.mxu0 0.0
          %1734 = vmatprep.subr.mxu0 0.0
          %1735 = vmatpush2.msra.mxu0 0.0
          %1736 = vmatprep.subr.mxu0 0.0
          %1737 = vmatpush2.msra.mxu0 0.0
          %1738 = vmatprep.subr.mxu0 0.0
          %1739 = vmatpush2.msra.mxu0 0.0
          %1740 = vmatprep.subr.mxu0 0.0
          %1741 = vmatpush2.msra.mxu0 0.0
          %1742 = vmatprep.subr.mxu0 0.0
          %1743 = vmatpush2.msra.mxu0 0.0
          %1744 = vmatprep.subr.mxu0 0.0
          %1745 = vmatpush2.msra.mxu0 0.0
          %1746 = vmatprep.subr.mxu0 0.0
          %1747 = vmatpush2.msra.mxu0 0.0
          %1748 = vmatprep.subr.mxu0 0.0
          %1749 = vmatpush2.msra.mxu0 0.0
          %1750 = vmatprep.subr.mxu0 0.0
          %1751 = vmatpush2.msra.mxu0 0.0
          %1752 = vmatprep.subr.mxu0 0.0
          %1753 = vmatpush2.msra.mxu0 0.0
          %1754 = vmatprep.mubr.f32.mxu0 0.0
          %1755 = vmatmul.mubr.f32.gmra.mxu0 %v1688
          %v1756 = vpop.f32.mrf.mxu0
          %v1757 = vadd.f32 0.0, %v1756
          %v1758 = vpop.f32.mrf.mxu0
          %1759 = vdwg.mxu0
          %v1760 = vpack.c.bf16 %v1757, %v1757
          %v1761 = vld [vmem:[%s17] sm:$0xf]
          %v1762 = vld [vmem:[%s17 + $0x4] sm:$0xf]
          %v1763 = vld [vmem:[%s17 + $0x8] sm:$0xf]
          %v1764 = vld [vmem:[%s17 + $0xc] sm:$0xf]
          %v1769 = vunpack.c.l.b16 %v1761
          %v1770 = vunpack.c.l.b16 %v1762
          %v1771 = vunpack.c.l.b16 %v1763
          %v1772 = vunpack.c.l.b16 %v1764
          %v1773 = vpack.c.b16 %v1770, %v1769
          %v1774 = vpack.c.b16 %v1772, %v1771
          %v1778 = vsel %vm806, %v1760, 0
          %1780 = vmatprep.subr.bf16.mxu0 0
          %1781 = vmatpush1.bf16.msra.mxu0 0
          %1782 = vmatprep.subr.bf16.mxu0 0
          %1783 = vmatpush1.bf16.msra.mxu0 0
          %1784 = vmatprep.subr.bf16.mxu0 0
          %1785 = vmatpush1.bf16.msra.mxu0 0
          %1786 = vmatprep.subr.bf16.mxu0 0
          %1787 = vmatpush1.bf16.msra.mxu0 0
          %1788 = vmatprep.subr.bf16.mxu0 0
          %1789 = vmatpush1.bf16.msra.mxu0 0
          %1790 = vmatprep.subr.bf16.mxu0 0
          %1791 = vmatpush1.bf16.msra.mxu0 0
          %1792 = vmatprep.subr.bf16.mxu0 0
          %1793 = vmatpush1.bf16.msra.mxu0 %v1774
          %1794 = vmatprep.subr.bf16.mxu0 0
          %1795 = vmatpush1.bf16.msra.mxu0 %v1773
          %1796 = vmatprep.subr.bf16.mxu0 0
          %1797 = vmatpush2.bf16.msra.mxu0 0
          %1798 = vmatprep.subr.bf16.mxu0 0
          %1799 = vmatpush2.bf16.msra.mxu0 0
          %1800 = vmatprep.subr.bf16.mxu0 0
          %1801 = vmatpush2.bf16.msra.mxu0 0
          %1802 = vmatprep.subr.bf16.mxu0 0
          %1803 = vmatpush2.bf16.msra.mxu0 0
          %1804 = vmatprep.subr.bf16.mxu0 0
          %1805 = vmatpush2.bf16.msra.mxu0 0
          %1806 = vmatprep.subr.bf16.mxu0 0
          %1807 = vmatpush2.bf16.msra.mxu0 0
          %1808 = vmatprep.subr.bf16.mxu0 0
          %1809 = vmatpush2.bf16.msra.mxu0 0
          %1810 = vmatprep.subr.bf16.mxu0 0
          %1811 = vmatpush2.bf16.msra.mxu0 0
          %1812 = vmatprep.mubr.bf16.mxu0 0
          %1813 = vmatmul.mubr.bf16.gmra.mxu0 %v1778
          %v1814 = vpop.f32.mrf.mxu0
          %v1815 = vadd.f32 0.0, %v1814
          %v1816 = vpop.f32.mrf.mxu0
          %v1817 = vpop.f32.mrf.mxu0
          %v1818 = vpop.f32.mrf.mxu0
          %1819 = vdwg.mxu0
          %1820 = vst [vmem:[%s736] sm:$0x1] %v1815
        $region100: #{tpu_custom_call.1} parent=91 // pred_fallthru
          _
        %s1821 = sand.u32 %s500, 1
        %s1822 = scalar_lea.sflag [#allocation4], %s1821
        %s1823 = sand.u32 %s500, 1
        %s1824 = scalar_lea.vmem [#allocation3], %s1823
        // Predicated region
        $region101: #{tpu_custom_call.1} parent=91 // pred_check
          %p1825 = pneg %p510
        $region102: #{tpu_custom_call.1} parent=91 // pred_check_branch
          %1827 = sbr.rel (%p1825) target = $region104
        $region103: #{tpu_custom_call.1} parent=91 // pred_region
          %s1829 = ssub.s32 16, 16
          %1830 = vsyncadd %s1822, %s1829
          %s1831 = smul.addr %s36, 16
          %s1832 = scalar_lea.hbm %s18, %s1831
          %s1834 = sshll.u32 %s1824, 4
          %s1835 = int_to_ptr.vmem [resolvable:$true] %s1834
          %1837 = dma.vmem_to_hbm [thread:$0]  %s1835, 16, %s1832, %s1822
        $region104: #{tpu_custom_call.1} parent=91 // pred_fallthru
          _
      $region92: #{tpu_custom_call.1} parent=5 // pred_fallthru
        _
      %p1838 = scmp.le.s32.totalorder 2, %s27
      // Predicated region
      $region105: #{tpu_custom_call.1} parent=5 // pred_check
        %p1839 = pneg %p1838
      $region106: #{tpu_custom_call.1} parent=5 // pred_check_branch
        %1841 = sbr.rel (%p1839) target = $region108
      $region107: #{tpu_custom_call.1} parent=5 // pred_region
        %s1842 = ssub.s32 %s27, 2
        // Predicated region
        $region109: #{tpu_custom_call.1} parent=107 // pred_check
          %p1843 = pneg %p516
        $region110: #{tpu_custom_call.1} parent=107 // pred_check_branch
          %1845 = sbr.rel (%p1843) target = $region112
        $region111: #{tpu_custom_call.1} parent=107 // pred_region
          %s1846 = sand.u32 %s501, 1
          %s1847 = scalar_lea.sflag [#allocation4], %s1846
          %s1848 = sand.u32 %s501, 1
          %s1849 = scalar_lea.vmem [#allocation3], %s1848
          %1850 = dma.done %s1847, 16
        $region112: #{tpu_custom_call.1} parent=107 // pred_fallthru
          _
      $region108: #{tpu_custom_call.1} parent=5 // pred_fallthru
        _
    $region6: #{tpu_custom_call.1} parent=1 // loop_footer
      %s31 = sadd.s32 1, %s27
    $region7: #{tpu_custom_call.1} parent=1 // loop_footer_branch
      %26 = sbr.rel target = $region3
    $region8: #{tpu_custom_call.1} parent=1 // loop_exit
      _
    %1851 = vsyncpa [#allocation4], 1
    %s1852 = scalar_lea.sflag [#allocation4], 1
    %1853 = vsyncpa %s1852, 1

</llo_original>
